<compile_context>
chip_gen: v7x
topology: tpu7x:2x2x1
jax: 0.10.0
libtpu: 0.0.40
codegen_flags: <defaults>
</compile_context>

<pallas_src>
import math
from functools import partial

import numpy as np
import jax
import jax.numpy as jnp
from jax.experimental import pallas as pl
from jax.experimental.pallas import tpu as pltpu

# ---- small, module-consistent sizes ----
B, LQ, LM, D, H, FF = 2, 8, 16, 32, 4, 64   # batch, tgt len, memory len, d_model, nhead, dim_ff
HD = D // H
HB = H * B * LM                              # 128: lane width of the combined (head,batch) slab
EPS = 1e-5


def _layernorm(x, g, b):
    mu = jnp.mean(x, axis=-1, keepdims=True)
    xc = x - mu
    var = jnp.mean(xc * xc, axis=-1, keepdims=True)
    return xc * jax.lax.rsqrt(var + EPS) * g + b


def _erf(x):
    # Abramowitz-Stegun 7.1.26, |err| <= 1.5e-7 (float32-exact GELU) using only
    # ops guaranteed to lower in Mosaic (abs/exp/div/select).
    a1, a2, a3, a4, a5 = 0.254829592, -0.284496736, 1.421413741, -1.453152027, 1.061405429
    pc = 0.3275911
    ax = jnp.abs(x)
    t = 1.0 / (1.0 + pc * ax)
    poly = ((((a5 * t + a4) * t + a3) * t + a2) * t + a1) * t
    y = 1.0 - poly * jnp.exp(-ax * ax)
    return jnp.where(x >= 0, y, -y)


def _decoder_kernel(n_items, x_ref, mem_ref, memt_ref, w64_ref, w32_ref, vec_ref,
                    c128_ref, c32_ref, out_ref):
    """Whole layer (both streams, all batches, all heads) in one grid step."""
    R = n_items * LQ
    BLM = B * LM

    x = x_ref[...]            # (R, D)     stacked [query; content] rows
    mem = mem_ref[...]        # (B*LM, D)  flattened memory
    memt = memt_ref[...]      # (D, 128)   memory^T replicated H times along lanes

    # ---- packed parameters: every split is a sublane (row) slice -> free ----
    w64 = w64_ref[...]
    wqv_t = w64[0:D, :]                  # (D, 2D)  [Wq^T/sqrt(hd) | Wv^T]
    w1_t = w64[D:2 * D, :]               # (D, FF)
    b1 = w64[2 * D:2 * D + 1, :]         # (1, FF)

    w32 = w32_ref[...]
    wk = w32[0:D, :]                     # (D, D)
    wo_t = w32[D:2 * D, :]               # (D, D)
    w2_t = w32[2 * D:2 * D + FF, :]      # (FF, D)

    vec = vec_ref[...]                   # (8, D) one vector per row
    n1g, n1b, n2g, n2b = vec[0:1, :], vec[1:2, :], vec[2:3, :], vec[3:4, :]
    bq, bv, bo, b2 = vec[4:5, :], vec[5:6, :], vec[6:7, :], vec[7:8, :]

    c128 = c128_ref[...]                 # (224, 128) packed structural constants
    ones_bd = c128[0:HB, :]              # (128,128) 16-lane block-diagonal ones
    hmk = c128[HB:HB + D, :]             # (32,128)  head mask for K^T
    bkm = c128[HB + D:HB + 2 * D, :]     # (32,128)  head-masked, replicated bk
    bm = c128[HB + 2 * D:HB + 2 * D + R, :]   # (R,128) batch-validity mask (per item row)

    c32 = c32_ref[...]                   # (256, 32)
    hmv = c32[0:HB, :]                   # (128,32)  head mask for V
    t_avg = c32[HB:2 * HB, :]            # (128,32)  (1/H)-averaging matrix (lanes >= LM are 0)

    # ---- projections ----
    xn1 = _layernorm(x, n1g, n1b)
    # merged Q / V projection: one tall matmul over [normed targets ; memory]
    qv = jnp.dot(jnp.concatenate([xn1, mem], axis=0), wqv_t,
                 preferred_element_type=jnp.float32)             # (R+BLM, 2D)
    q = qv[0:R, 0:D] + bq                                        # (R, D)  1/sqrt(hd) folded in
    v = qv[R:R + BLM, D:2 * D] + bv                              # (BLM, D)

    # block-diagonal K^T over (head, batch): ONE matmul + mask, no transpose, no per-head slices
    kt_bd = jnp.dot(wk, memt, preferred_element_type=jnp.float32) * hmk + bkm   # (D, 128)
    # block-diagonal V over (head, batch): cheap sublane tile + mask
    v_bd = jnp.concatenate([v] * H, axis=0) * hmv                               # (128, D)

    # ---- attention for all items x heads x batches in single full-slab ops ----
    s = jnp.dot(q, kt_bd, preferred_element_type=jnp.float32)    # (R, 128) per-head scores
    s = s - jnp.max(s, axis=-1, keepdims=True)                   # one row reduce (shift-invariant)
    e = jnp.exp(s)
    denom = jnp.dot(e, ones_bd, preferred_element_type=jnp.float32)   # per-16-block sums, broadcast
    prob = e * pl.reciprocal(denom, approx=True) * bm            # normalized; wrong-batch lanes -> 0

    ctx = jnp.dot(prob, v_bd, preferred_element_type=jnp.float32)          # (R, D) heads lane-concat
    t_attn = jnp.dot(ctx, wo_t, preferred_element_type=jnp.float32) + bo   # replaces tgt (no residual)

    # head-averaged attention weights, only for the stream that forward() returns
    prob_last = prob[R - B * LQ:R, :]
    attn = jnp.dot(prob_last, t_avg, preferred_element_type=jnp.float32)   # (B*LQ, D), lanes>=LM zero

    # ---- feed-forward (pre-LN) over all rows at once ----
    y = _layernorm(t_attn, n2g, n2b)
    h1 = jnp.dot(y, w1_t, preferred_element_type=jnp.float32) + b1
    h1 = 0.5 * h1 * (1.0 + _erf(h1 * (1.0 / math.sqrt(2.0))))    # exact (erf) GELU
    h2 = jnp.dot(h1, w2_t, preferred_element_type=jnp.float32) + b2
    y_out = t_attn + h2                                          # (R, D)

    # single output slab: [decoder rows ; attention-weight rows]  (one store, one DMA)
    out_ref[...] = jnp.concatenate([y_out, attn], axis=0)


def pack_params(p):
    """One-time packing: 5 kernel operands, all splits sublane-aligned, head/batch
    structure baked into block-diagonal constants."""
    scale = 1.0 / math.sqrt(HD)

    # lane-width-64 group: [Wq^T*scale | Wv^T] ; W1^T ; b1   -> (65, 64)
    wqv_t = jnp.concatenate([p['wq'].T * scale, p['wv'].T], axis=1)
    w64 = jnp.concatenate([wqv_t, p['w1'].T, p['b1'][None, :]], axis=0)

    # lane-width-32 group: Wk ; Wo^T ; W2^T                  -> (128, 32)
    w32 = jnp.concatenate([p['wk'], p['wo'].T, p['w2'].T], axis=0)

    # one 32-lane row per vector (no lane slicing needed in the kernel)
    vec32 = jnp.stack([p['norm1_g'], p['norm1_b'], p['norm2_g'], p['norm2_b'],
                       p['bq'] * scale, p['bv'], p['bo'], p['b2']], axis=0)

    # ---- structural constants (built once, host-side) ----
    # score-slab lane index: c = h*(B*LM) + b*LM + m
    c = np.arange(HB)
    d_idx = np.arange(D)
    r_idx = np.arange(2 * B * LQ)        # max row count (both streams)

    ones_bd = (c[:, None] // LM == c[None, :] // LM).astype(np.float32)           # (128,128)
    hmk = (d_idx[:, None] // HD == c[None, :] // (B * LM)).astype(np.float32)     # (32,128)
    bm = ((c[None, :] % (B * LM)) // LM ==
          (r_idx[:, None] // LQ) % B).astype(np.float32)                          # (32,128)
    hmv = (c[:, None] // (B * LM) == d_idx[None, :] // HD).astype(np.float32)     # (128,32)
    t_avg = np.zeros((HB, D), np.float32)
    t_avg[c, c % LM] = 1.0 / H                                                    # (128,32)

    bkm = p['bk'][:, None] * jnp.asarray(hmk)                                     # (32,128)
    c128 = jnp.concatenate([jnp.asarray(ones_bd), jnp.asarray(hmk), bkm,
                            jnp.asarray(bm)], axis=0)                             # (224,128)
    c32 = jnp.asarray(np.concatenate([hmv, t_avg], axis=0))                       # (256,32)
    return w64, w32, vec32, c128, c32


@partial(jax.jit, static_argnames=("update_content",))
def decoder_layer_forward(query, content, memory, packed, update_content=True):
    w64, w32, vec32, c128, c32 = packed
    b_, lq, d = query.shape
    lm = memory.shape[1]

    tgt = jnp.concatenate([query, content], axis=0) if update_content else query
    n_items = tgt.shape[0]                       # derived from GLOBAL item count (fixes old bug)
    R = n_items * lq
    x = tgt.reshape(R, d)
    mem = memory.reshape(b_ * lm, d)
    memt = jnp.tile(mem.T, (1, H))               # (D, H*B*LM): lane replication done by XLA once

    out_rows = R + b_ * lq
    out = pl.pallas_call(
        partial(_decoder_kernel, n_items),
        grid=(1,),                               # single TensorCore, single step (see header note)
        in_specs=[
            pl.BlockSpec((R, d), lambda i: (0, 0)),
            pl.BlockSpec((b_ * lm, d), lambda i: (0, 0)),
            pl.BlockSpec((d, HB), lambda i: (0, 0)),
            pl.BlockSpec(w64.shape, lambda i: (0, 0)),
            pl.BlockSpec(w32.shape, lambda i: (0, 0)),
            pl.BlockSpec(vec32.shape, lambda i: (0, 0)),
            pl.BlockSpec(c128.shape, lambda i: (0, 0)),
            pl.BlockSpec(c32.shape, lambda i: (0, 0)),
        ],
        out_specs=pl.BlockSpec((out_rows, d), lambda i: (0, 0)),
        out_shape=jax.ShapeDtypeStruct((out_rows, d), jnp.float32),
        compiler_params=pltpu.CompilerParams(dimension_semantics=("arbitrary",)),
    )(x, mem, memt, w64, w32, vec32, c128, c32)

    # pure slice + reshape unpacking (no transposes)
    y_all = out[0:R].reshape(n_items, lq, d)
    query_out = y_all[0:b_]
    content_out = y_all[b_:] if update_content else content
    ca = out[R:out_rows, 0:lm].reshape(b_, lq, lm)   # weights of the last-computed stream
    return query_out, content_out, None, ca


# ---------------- pure-JAX reference (correctness sanity check) ----------------
def _ref_ln(x, g, b):
    mu = x.mean(-1, keepdims=True)
    var = ((x - mu) ** 2).mean(-1, keepdims=True)
    return (x - mu) / jnp.sqrt(var + EPS) * g + b


def ref_forward_stream(tgt, memory, p):
    x = _ref_ln(tgt, p['norm1_g'], p['norm1_b'])
    q = x @ p['wq'].T + p['bq']
    k = memory @ p['wk'].T + p['bk']
    v = memory @ p['wv'].T + p['bv']
    b_, lq, _ = q.shape
    lm = k.shape[1]
    qh = q.reshape(b_, lq, H, HD).transpose(0, 2, 1, 3)
    kh = k.reshape(b_, lm, H, HD).transpose(0, 2, 1, 3)
    vh = v.reshape(b_, lm, H, HD).transpose(0, 2, 1, 3)
    s = jnp.einsum('bhqd,bhkd->bhqk', qh, kh) / math.sqrt(HD)
    pr = jax.nn.softmax(s, axis=-1)
    ctx = jnp.einsum('bhqk,bhkd->bhqd', pr, vh).transpose(0, 2, 1, 3).reshape(b_, lq, D)
    t = ctx @ p['wo'].T + p['bo']
    y = _ref_ln(t, p['norm2_g'], p['norm2_b'])
    h1 = y @ p['w1'].T + p['b1']
    h1 = 0.5 * h1 * (1.0 + jax.lax.erf(h1 / math.sqrt(2.0)))
    h2 = h1 @ p['w2'].T + p['b2']
    return t + h2, pr.mean(axis=1)


def init_params(key):
    ks = jax.random.split(key, 6)
    s = 0.02
    return {
        'wq': s * jax.random.normal(ks[0], (D, D), jnp.float32),
        'wk': s * jax.random.normal(ks[1], (D, D), jnp.float32),
        'wv': s * jax.random.normal(ks[2], (D, D), jnp.float32),
        'bq': jnp.zeros((D,), jnp.float32),
        'bk': 0.01 * jnp.ones((D,), jnp.float32),
        'bv': jnp.zeros((D,), jnp.float32),
        'wo': s * jax.random.normal(ks[3], (D, D), jnp.float32),
        'bo': 0.01 * jnp.ones((D,), jnp.float32),
        'w1': s * jax.random.normal(ks[4], (FF, D), jnp.float32),
        'b1': 0.01 * jnp.ones((FF,), jnp.float32),
        'w2': s * jax.random.normal(ks[5], (D, FF), jnp.float32),
        'b2': 0.01 * jnp.ones((D,), jnp.float32),
        'norm1_g': jnp.ones((D,), jnp.float32), 'norm1_b': jnp.zeros((D,), jnp.float32),
        'norm2_g': jnp.ones((D,), jnp.float32), 'norm2_b': jnp.zeros((D,), jnp.float32),
    }


if __name__ == "__main__":
    key = jax.random.PRNGKey(0)
    kq, kc, km, kp = jax.random.split(key, 4)
    query = jax.random.normal(kq, (B, LQ, D), jnp.float32)
    content = jax.random.normal(kc, (B, LQ, D), jnp.float32)
    memory = jax.random.normal(km, (B, LM, D), jnp.float32)
    params = init_params(kp)
    packed = pack_params(params)     # one-time packing of weights + structural constants

    # both-stream path
    q_out, c_out, sa_w, ca_w = decoder_layer_forward(query, content, memory, packed,
                                                     update_content=True)
    jax.block_until_ready((q_out, c_out, ca_w))

    q_ref, ca_q_ref = ref_forward_stream(query, memory, params)
    c_ref, ca_c_ref = ref_forward_stream(content, memory, params)
    assert jnp.allclose(q_out, q_ref, atol=5e-3, rtol=5e-3)
    assert jnp.allclose(c_out, c_ref, atol=5e-3, rtol=5e-3)
    assert jnp.allclose(ca_w, ca_c_ref, atol=5e-3, rtol=5e-3)

    # query-only path (update_content=False): content passes through, weights from query stream
    q2, c2, _, ca2 = decoder_layer_forward(query, content, memory, packed,
                                           update_content=False)
    jax.block_until_ready((q2, c2, ca2))
    assert jnp.allclose(q2, q_ref, atol=5e-3, rtol=5e-3)
    assert jnp.allclose(c2, content)
    assert jnp.allclose(ca2, ca_q_ref, atol=5e-3, rtol=5e-3)

    print("KERNEL_OK")
</pallas_src>

<mosaic_0001>
module attributes {stable_mosaic.version = 11 : i64} {
  func.func @_decoder_kernel(%arg0: i32, %arg1: memref<32x32xf32, #tpu.memory_space<vmem>>, %arg2: memref<32x32xf32, #tpu.memory_space<vmem>>, %arg3: memref<32x128xf32, #tpu.memory_space<vmem>>, %arg4: memref<65x64xf32, #tpu.memory_space<vmem>>, %arg5: memref<128x32xf32, #tpu.memory_space<vmem>>, %arg6: memref<8x32xf32, #tpu.memory_space<vmem>>, %arg7: memref<224x128xf32, #tpu.memory_space<vmem>>, %arg8: memref<256x32xf32, #tpu.memory_space<vmem>>, %arg9: memref<48x32xf32, #tpu.memory_space<vmem>>) attributes {dimension_semantics = [#tpu.dimension_semantics<arbitrary>], iteration_bounds = array<i64: 1>, scalar_prefetch = 0 : i64, scratch_operands = 0 : i64, tpu.core_type = #tpu.core_type<tc>, window_params = [{pipeline_mode = #tpu.pipeline_mode<synchronous>, transform_indices = @transform_0, window_bounds = array<i64: 32, 32>}, {pipeline_mode = #tpu.pipeline_mode<synchronous>, transform_indices = @transform_1, window_bounds = array<i64: 32, 32>}, {pipeline_mode = #tpu.pipeline_mode<synchronous>, transform_indices = @transform_2, window_bounds = array<i64: 32, 128>}, {pipeline_mode = #tpu.pipeline_mode<synchronous>, transform_indices = @transform_3, window_bounds = array<i64: 65, 64>}, {pipeline_mode = #tpu.pipeline_mode<synchronous>, transform_indices = @transform_4, window_bounds = array<i64: 128, 32>}, {pipeline_mode = #tpu.pipeline_mode<synchronous>, transform_indices = @transform_5, window_bounds = array<i64: 8, 32>}, {pipeline_mode = #tpu.pipeline_mode<synchronous>, transform_indices = @transform_6, window_bounds = array<i64: 224, 128>}, {pipeline_mode = #tpu.pipeline_mode<synchronous>, transform_indices = @transform_7, window_bounds = array<i64: 256, 32>}, {pipeline_mode = #tpu.pipeline_mode<synchronous>, transform_indices = @transform_8, window_bounds = array<i64: 48, 32>}]} {
    %c0 = arith.constant 0 : index
    %c0_0 = arith.constant 0 : index
    %0 = vector.load %arg1[%c0, %c0_0] : memref<32x32xf32, #tpu.memory_space<vmem>>, vector<32x32xf32>
    %c0_1 = arith.constant 0 : index
    %c0_2 = arith.constant 0 : index
    %1 = vector.load %arg2[%c0_1, %c0_2] : memref<32x32xf32, #tpu.memory_space<vmem>>, vector<32x32xf32>
    %c0_3 = arith.constant 0 : index
    %c0_4 = arith.constant 0 : index
    %2 = vector.load %arg3[%c0_3, %c0_4] : memref<32x128xf32, #tpu.memory_space<vmem>>, vector<32x128xf32>
    %c0_5 = arith.constant 0 : index
    %c0_6 = arith.constant 0 : index
    %3 = vector.load %arg4[%c0_5, %c0_6] : memref<65x64xf32, #tpu.memory_space<vmem>>, vector<65x64xf32>
    %4 = vector.extract_strided_slice %3 {offsets = [0, 0], sizes = [32, 64], strides = [1, 1]} : vector<65x64xf32> to vector<32x64xf32>
    %5 = vector.extract_strided_slice %3 {offsets = [32, 0], sizes = [32, 64], strides = [1, 1]} : vector<65x64xf32> to vector<32x64xf32>
    %6 = vector.extract_strided_slice %3 {offsets = [64, 0], sizes = [1, 64], strides = [1, 1]} : vector<65x64xf32> to vector<1x64xf32>
    %c0_7 = arith.constant 0 : index
    %c0_8 = arith.constant 0 : index
    %7 = vector.load %arg5[%c0_7, %c0_8] : memref<128x32xf32, #tpu.memory_space<vmem>>, vector<128x32xf32>
    %8 = vector.extract_strided_slice %7 {offsets = [0, 0], sizes = [32, 32], strides = [1, 1]} : vector<128x32xf32> to vector<32x32xf32>
    %9 = vector.extract_strided_slice %7 {offsets = [32, 0], sizes = [32, 32], strides = [1, 1]} : vector<128x32xf32> to vector<32x32xf32>
    %10 = vector.extract_strided_slice %7 {offsets = [64, 0], sizes = [64, 32], strides = [1, 1]} : vector<128x32xf32> to vector<64x32xf32>
    %c0_9 = arith.constant 0 : index
    %c0_10 = arith.constant 0 : index
    %11 = vector.load %arg6[%c0_9, %c0_10] : memref<8x32xf32, #tpu.memory_space<vmem>>, vector<8x32xf32>
    %12 = vector.extract_strided_slice %11 {offsets = [0, 0], sizes = [1, 32], strides = [1, 1]} : vector<8x32xf32> to vector<1x32xf32>
    %13 = vector.extract_strided_slice %11 {offsets = [1, 0], sizes = [1, 32], strides = [1, 1]} : vector<8x32xf32> to vector<1x32xf32>
    %14 = vector.extract_strided_slice %11 {offsets = [2, 0], sizes = [1, 32], strides = [1, 1]} : vector<8x32xf32> to vector<1x32xf32>
    %15 = vector.extract_strided_slice %11 {offsets = [3, 0], sizes = [1, 32], strides = [1, 1]} : vector<8x32xf32> to vector<1x32xf32>
    %16 = vector.extract_strided_slice %11 {offsets = [4, 0], sizes = [1, 32], strides = [1, 1]} : vector<8x32xf32> to vector<1x32xf32>
    %17 = vector.extract_strided_slice %11 {offsets = [5, 0], sizes = [1, 32], strides = [1, 1]} : vector<8x32xf32> to vector<1x32xf32>
    %18 = vector.extract_strided_slice %11 {offsets = [6, 0], sizes = [1, 32], strides = [1, 1]} : vector<8x32xf32> to vector<1x32xf32>
    %19 = vector.extract_strided_slice %11 {offsets = [7, 0], sizes = [1, 32], strides = [1, 1]} : vector<8x32xf32> to vector<1x32xf32>
    %c0_11 = arith.constant 0 : index
    %c0_12 = arith.constant 0 : index
    %20 = vector.load %arg7[%c0_11, %c0_12] : memref<224x128xf32, #tpu.memory_space<vmem>>, vector<224x128xf32>
    %21 = vector.extract_strided_slice %20 {offsets = [0, 0], sizes = [128, 128], strides = [1, 1]} : vector<224x128xf32> to vector<128x128xf32>
    %22 = vector.extract_strided_slice %20 {offsets = [128, 0], sizes = [32, 128], strides = [1, 1]} : vector<224x128xf32> to vector<32x128xf32>
    %23 = vector.extract_strided_slice %20 {offsets = [160, 0], sizes = [32, 128], strides = [1, 1]} : vector<224x128xf32> to vector<32x128xf32>
    %24 = vector.extract_strided_slice %20 {offsets = [192, 0], sizes = [32, 128], strides = [1, 1]} : vector<224x128xf32> to vector<32x128xf32>
    %c0_13 = arith.constant 0 : index
    %c0_14 = arith.constant 0 : index
    %25 = vector.load %arg8[%c0_13, %c0_14] : memref<256x32xf32, #tpu.memory_space<vmem>>, vector<256x32xf32>
    %26 = vector.extract_strided_slice %25 {offsets = [0, 0], sizes = [128, 32], strides = [1, 1]} : vector<256x32xf32> to vector<128x32xf32>
    %27 = vector.extract_strided_slice %25 {offsets = [128, 0], sizes = [128, 32], strides = [1, 1]} : vector<256x32xf32> to vector<128x32xf32>
    %cst = arith.constant dense<0.000000e+00> : vector<32xf32>
    %28 = vector.multi_reduction <add>, %0, %cst [1] : vector<32x32xf32> to vector<32xf32>
    %29 = vector.shape_cast %28 : vector<32xf32> to vector<32x1xf32>
    %cst_15 = arith.constant 3.200000e+01 : f32
    %30 = vector.broadcast %cst_15 : f32 to vector<32x1xf32>
    %31 = arith.divf %29, %30 : vector<32x1xf32>
    %32 = vector.broadcast %31 : vector<32x1xf32> to vector<32x32xf32>
    %33 = arith.subf %0, %32 : vector<32x32xf32>
    %34 = arith.mulf %33, %33 : vector<32x32xf32>
    %cst_16 = arith.constant dense<0.000000e+00> : vector<32xf32>
    %35 = vector.multi_reduction <add>, %34, %cst_16 [1] : vector<32x32xf32> to vector<32xf32>
    %36 = vector.shape_cast %35 : vector<32xf32> to vector<32x1xf32>
    %cst_17 = arith.constant 3.200000e+01 : f32
    %37 = vector.broadcast %cst_17 : f32 to vector<32x1xf32>
    %38 = arith.divf %36, %37 : vector<32x1xf32>
    %cst_18 = arith.constant 9.99999974E-6 : f32
    %39 = vector.broadcast %cst_18 : f32 to vector<32x1xf32>
    %40 = arith.addf %38, %39 : vector<32x1xf32>
    %41 = math.rsqrt %40 : vector<32x1xf32>
    %42 = vector.broadcast %41 : vector<32x1xf32> to vector<32x32xf32>
    %43 = arith.mulf %33, %42 : vector<32x32xf32>
    %44 = vector.broadcast %12 : vector<1x32xf32> to vector<32x32xf32>
    %45 = arith.mulf %43, %44 : vector<32x32xf32>
    %46 = vector.broadcast %13 : vector<1x32xf32> to vector<32x32xf32>
    %47 = arith.addf %45, %46 : vector<32x32xf32>
    %48 = tpu.concatenate %47, %1 in 0 : vector<32x32xf32>, vector<32x32xf32> -> vector<64x32xf32>
    %cst_19 = arith.constant dense<0.000000e+00> : vector<64x64xf32>
    %49 = tpu.matmul %48, %4, %cst_19 {dimension_numbers = #tpu.dot_dimension_numbers<[1], [0], [0], [1], [0, 0, 1, 1], [], []>} : vector<64x32xf32>, vector<32x64xf32>, vector<64x64xf32> -> vector<64x64xf32>
    %50 = vector.extract_strided_slice %49 {offsets = [0, 0], sizes = [32, 32], strides = [1, 1]} : vector<64x64xf32> to vector<32x32xf32>
    %51 = vector.broadcast %16 : vector<1x32xf32> to vector<32x32xf32>
    %52 = arith.addf %50, %51 : vector<32x32xf32>
    %53 = vector.extract_strided_slice %49 {offsets = [32, 32], sizes = [32, 32], strides = [1, 1]} : vector<64x64xf32> to vector<32x32xf32>
    %54 = vector.broadcast %17 : vector<1x32xf32> to vector<32x32xf32>
    %55 = arith.addf %53, %54 : vector<32x32xf32>
    %cst_20 = arith.constant dense<0.000000e+00> : vector<32x128xf32>
    %56 = tpu.matmul %8, %2, %cst_20 {dimension_numbers = #tpu.dot_dimension_numbers<[1], [0], [0], [1], [0, 0, 1, 1], [], []>} : vector<32x32xf32>, vector<32x128xf32>, vector<32x128xf32> -> vector<32x128xf32>
    %57 = arith.mulf %56, %22 : vector<32x128xf32>
    %58 = arith.addf %57, %23 : vector<32x128xf32>
    %59 = tpu.concatenate %55, %55, %55, %55 in 0 : vector<32x32xf32>, vector<32x32xf32>, vector<32x32xf32>, vector<32x32xf32> -> vector<128x32xf32>
    %60 = arith.mulf %59, %26 : vector<128x32xf32>
    %cst_21 = arith.constant dense<0.000000e+00> : vector<32x128xf32>
    %61 = tpu.matmul %52, %58, %cst_21 {dimension_numbers = #tpu.dot_dimension_numbers<[1], [0], [0], [1], [0, 0, 1, 1], [], []>} : vector<32x32xf32>, vector<32x128xf32>, vector<32x128xf32> -> vector<32x128xf32>
    %cst_22 = arith.constant dense<0xFF800000> : vector<32xf32>
    %62 = vector.multi_reduction <maximumf>, %61, %cst_22 [1] : vector<32x128xf32> to vector<32xf32>
    %63 = vector.shape_cast %62 : vector<32xf32> to vector<32x1xf32>
    %64 = vector.broadcast %63 : vector<32x1xf32> to vector<32x128xf32>
    %65 = arith.subf %61, %64 : vector<32x128xf32>
    %66 = math.exp %65 : vector<32x128xf32>
    %cst_23 = arith.constant dense<0.000000e+00> : vector<32x128xf32>
    %67 = tpu.matmul %66, %21, %cst_23 {dimension_numbers = #tpu.dot_dimension_numbers<[1], [0], [0], [1], [0, 0, 1, 1], [], []>} : vector<32x128xf32>, vector<128x128xf32>, vector<32x128xf32> -> vector<32x128xf32>
    %68 = tpu.reciprocal %67 {approx = true} : vector<32x128xf32> -> vector<32x128xf32>
    %69 = arith.mulf %66, %68 : vector<32x128xf32>
    %70 = arith.mulf %69, %24 : vector<32x128xf32>
    %cst_24 = arith.constant dense<0.000000e+00> : vector<32x32xf32>
    %71 = tpu.matmul %70, %60, %cst_24 {dimension_numbers = #tpu.dot_dimension_numbers<[1], [0], [0], [1], [0, 0, 1, 1], [], []>} : vector<32x128xf32>, vector<128x32xf32>, vector<32x32xf32> -> vector<32x32xf32>
    %cst_25 = arith.constant dense<0.000000e+00> : vector<32x32xf32>
    %72 = tpu.matmul %71, %9, %cst_25 {dimension_numbers = #tpu.dot_dimension_numbers<[1], [0], [0], [1], [0, 0, 1, 1], [], []>} : vector<32x32xf32>, vector<32x32xf32>, vector<32x32xf32> -> vector<32x32xf32>
    %73 = vector.broadcast %18 : vector<1x32xf32> to vector<32x32xf32>
    %74 = arith.addf %72, %73 : vector<32x32xf32>
    %75 = vector.extract_strided_slice %70 {offsets = [16, 0], sizes = [16, 128], strides = [1, 1]} : vector<32x128xf32> to vector<16x128xf32>
    %cst_26 = arith.constant dense<0.000000e+00> : vector<16x32xf32>
    %76 = tpu.matmul %75, %27, %cst_26 {dimension_numbers = #tpu.dot_dimension_numbers<[1], [0], [0], [1], [0, 0, 1, 1], [], []>} : vector<16x128xf32>, vector<128x32xf32>, vector<16x32xf32> -> vector<16x32xf32>
    %cst_27 = arith.constant dense<0.000000e+00> : vector<32xf32>
    %77 = vector.multi_reduction <add>, %74, %cst_27 [1] : vector<32x32xf32> to vector<32xf32>
    %78 = vector.shape_cast %77 : vector<32xf32> to vector<32x1xf32>
    %cst_28 = arith.constant 3.200000e+01 : f32
    %79 = vector.broadcast %cst_28 : f32 to vector<32x1xf32>
    %80 = arith.divf %78, %79 : vector<32x1xf32>
    %81 = vector.broadcast %80 : vector<32x1xf32> to vector<32x32xf32>
    %82 = arith.subf %74, %81 : vector<32x32xf32>
    %83 = arith.mulf %82, %82 : vector<32x32xf32>
    %cst_29 = arith.constant dense<0.000000e+00> : vector<32xf32>
    %84 = vector.multi_reduction <add>, %83, %cst_29 [1] : vector<32x32xf32> to vector<32xf32>
    %85 = vector.shape_cast %84 : vector<32xf32> to vector<32x1xf32>
    %cst_30 = arith.constant 3.200000e+01 : f32
    %86 = vector.broadcast %cst_30 : f32 to vector<32x1xf32>
    %87 = arith.divf %85, %86 : vector<32x1xf32>
    %cst_31 = arith.constant 9.99999974E-6 : f32
    %88 = vector.broadcast %cst_31 : f32 to vector<32x1xf32>
    %89 = arith.addf %87, %88 : vector<32x1xf32>
    %90 = math.rsqrt %89 : vector<32x1xf32>
    %91 = vector.broadcast %90 : vector<32x1xf32> to vector<32x32xf32>
    %92 = arith.mulf %82, %91 : vector<32x32xf32>
    %93 = vector.broadcast %14 : vector<1x32xf32> to vector<32x32xf32>
    %94 = arith.mulf %92, %93 : vector<32x32xf32>
    %95 = vector.broadcast %15 : vector<1x32xf32> to vector<32x32xf32>
    %96 = arith.addf %94, %95 : vector<32x32xf32>
    %cst_32 = arith.constant dense<0.000000e+00> : vector<32x64xf32>
    %97 = tpu.matmul %96, %5, %cst_32 {dimension_numbers = #tpu.dot_dimension_numbers<[1], [0], [0], [1], [0, 0, 1, 1], [], []>} : vector<32x32xf32>, vector<32x64xf32>, vector<32x64xf32> -> vector<32x64xf32>
    %98 = vector.broadcast %6 : vector<1x64xf32> to vector<32x64xf32>
    %99 = arith.addf %97, %98 : vector<32x64xf32>
    %cst_33 = arith.constant 5.000000e-01 : f32
    %100 = vector.broadcast %cst_33 : f32 to vector<32x64xf32>
    %101 = arith.mulf %100, %99 : vector<32x64xf32>
    %cst_34 = arith.constant 0.707106769 : f32
    %102 = vector.broadcast %cst_34 : f32 to vector<32x64xf32>
    %103 = arith.mulf %99, %102 : vector<32x64xf32>
    %104 = math.absf %103 : vector<32x64xf32>
    %cst_35 = arith.constant 0.327591091 : f32
    %105 = vector.broadcast %cst_35 : f32 to vector<32x64xf32>
    %106 = arith.mulf %105, %104 : vector<32x64xf32>
    %cst_36 = arith.constant 1.000000e+00 : f32
    %107 = vector.broadcast %cst_36 : f32 to vector<32x64xf32>
    %108 = arith.addf %107, %106 : vector<32x64xf32>
    %cst_37 = arith.constant 1.000000e+00 : f32
    %109 = vector.broadcast %cst_37 : f32 to vector<32x64xf32>
    %110 = arith.divf %109, %108 : vector<32x64xf32>
    %cst_38 = arith.constant 1.06140542 : f32
    %111 = vector.broadcast %cst_38 : f32 to vector<32x64xf32>
    %112 = arith.mulf %111, %110 : vector<32x64xf32>
    %cst_39 = arith.constant -1.45315206 : f32
    %113 = vector.broadcast %cst_39 : f32 to vector<32x64xf32>
    %114 = arith.addf %112, %113 : vector<32x64xf32>
    %115 = arith.mulf %114, %110 : vector<32x64xf32>
    %cst_40 = arith.constant 1.42141378 : f32
    %116 = vector.broadcast %cst_40 : f32 to vector<32x64xf32>
    %117 = arith.addf %115, %116 : vector<32x64xf32>
    %118 = arith.mulf %117, %110 : vector<32x64xf32>
    %cst_41 = arith.constant -0.284496725 : f32
    %119 = vector.broadcast %cst_41 : f32 to vector<32x64xf32>
    %120 = arith.addf %118, %119 : vector<32x64xf32>
    %121 = arith.mulf %120, %110 : vector<32x64xf32>
    %cst_42 = arith.constant 0.254829586 : f32
    %122 = vector.broadcast %cst_42 : f32 to vector<32x64xf32>
    %123 = arith.addf %121, %122 : vector<32x64xf32>
    %124 = arith.mulf %123, %110 : vector<32x64xf32>
    %cst_43 = arith.constant 0.000000e+00 : f32
    %125 = vector.broadcast %cst_43 : f32 to vector<32x64xf32>
    %126 = arith.subf %125, %104 : vector<32x64xf32>
    %127 = arith.mulf %126, %104 : vector<32x64xf32>
    %128 = math.exp %127 : vector<32x64xf32>
    %129 = arith.mulf %124, %128 : vector<32x64xf32>
    %cst_44 = arith.constant 1.000000e+00 : f32
    %130 = vector.broadcast %cst_44 : f32 to vector<32x64xf32>
    %131 = arith.subf %130, %129 : vector<32x64xf32>
    %cst_45 = arith.constant 0.000000e+00 : f32
    %132 = vector.broadcast %cst_45 : f32 to vector<32x64xf32>
    %133 = arith.cmpf oge, %103, %132 : vector<32x64xf32>
    %cst_46 = arith.constant 0.000000e+00 : f32
    %134 = vector.broadcast %cst_46 : f32 to vector<32x64xf32>
    %135 = arith.subf %134, %131 : vector<32x64xf32>
    %136 = arith.select %133, %131, %135 : vector<32x64xi1>, vector<32x64xf32>
    %cst_47 = arith.constant 1.000000e+00 : f32
    %137 = vector.broadcast %cst_47 : f32 to vector<32x64xf32>
    %138 = arith.addf %137, %136 : vector<32x64xf32>
    %139 = arith.mulf %101, %138 : vector<32x64xf32>
    %cst_48 = arith.constant dense<0.000000e+00> : vector<32x32xf32>
    %140 = tpu.matmul %139, %10, %cst_48 {dimension_numbers = #tpu.dot_dimension_numbers<[1], [0], [0], [1], [0, 0, 1, 1], [], []>} : vector<32x64xf32>, vector<64x32xf32>, vector<32x32xf32> -> vector<32x32xf32>
    %141 = vector.broadcast %19 : vector<1x32xf32> to vector<32x32xf32>
    %142 = arith.addf %140, %141 : vector<32x32xf32>
    %143 = arith.addf %74, %142 : vector<32x32xf32>
    %144 = tpu.concatenate %143, %76 in 0 : vector<32x32xf32>, vector<16x32xf32> -> vector<48x32xf32>
    %c0_49 = arith.constant 0 : index
    %c0_50 = arith.constant 0 : index
    %145 = vector.load %arg9[%c0_49, %c0_50] : memref<48x32xf32, #tpu.memory_space<vmem>>, vector<48x32xf32>
    tpu.vector_store %arg9[%c0_49, %c0_50], %144 {strides = array<i32>} : memref<48x32xf32, #tpu.memory_space<vmem>>, vector<48x32xf32>,
    return
  }
  func.func @transform_0(%arg0: i32) -> (i32, i32) {
    %c0_i32 = arith.constant 0 : i32
    %c0_i32_0 = arith.constant 0 : i32
    %c0_i32_1 = arith.constant 0 : i32
    return %c0_i32, %c0_i32_0 : i32, i32
  }
  func.func @transform_1(%arg0: i32) -> (i32, i32) {
    %c0_i32 = arith.constant 0 : i32
    %c0_i32_0 = arith.constant 0 : i32
    %c0_i32_1 = arith.constant 0 : i32
    return %c0_i32, %c0_i32_0 : i32, i32
  }
  func.func @transform_2(%arg0: i32) -> (i32, i32) {
    %c0_i32 = arith.constant 0 : i32
    %c0_i32_0 = arith.constant 0 : i32
    %c0_i32_1 = arith.constant 0 : i32
    return %c0_i32, %c0_i32_0 : i32, i32
  }
  func.func @transform_3(%arg0: i32) -> (i32, i32) {
    %c0_i32 = arith.constant 0 : i32
    %c0_i32_0 = arith.constant 0 : i32
    %c0_i32_1 = arith.constant 0 : i32
    return %c0_i32, %c0_i32_0 : i32, i32
  }
  func.func @transform_4(%arg0: i32) -> (i32, i32) {
    %c0_i32 = arith.constant 0 : i32
    %c0_i32_0 = arith.constant 0 : i32
    %c0_i32_1 = arith.constant 0 : i32
    return %c0_i32, %c0_i32_0 : i32, i32
  }
  func.func @transform_5(%arg0: i32) -> (i32, i32) {
    %c0_i32 = arith.constant 0 : i32
    %c0_i32_0 = arith.constant 0 : i32
    %c0_i32_1 = arith.constant 0 : i32
    return %c0_i32, %c0_i32_0 : i32, i32
  }
  func.func @transform_6(%arg0: i32) -> (i32, i32) {
    %c0_i32 = arith.constant 0 : i32
    %c0_i32_0 = arith.constant 0 : i32
    %c0_i32_1 = arith.constant 0 : i32
    return %c0_i32, %c0_i32_0 : i32, i32
  }
  func.func @transform_7(%arg0: i32) -> (i32, i32) {
    %c0_i32 = arith.constant 0 : i32
    %c0_i32_0 = arith.constant 0 : i32
    %c0_i32_1 = arith.constant 0 : i32
    return %c0_i32, %c0_i32_0 : i32, i32
  }
  func.func @transform_8(%arg0: i32) -> (i32, i32) {
    %c0_i32 = arith.constant 0 : i32
    %c0_i32_0 = arith.constant 0 : i32
    %c0_i32_1 = arith.constant 0 : i32
    return %c0_i32, %c0_i32_0 : i32, i32
  }
}

</mosaic_0001>

<llo_original>
// kernel: tile.9
$region0: #{tile.9}
  %s0 = inlined_call_operand.vmem [shape: f32[32,4,32], index: 0, kind: input, shape index: {}]
  %s1 = inlined_call_operand.vmem [shape: f32[32,128], index: 1, kind: output, shape index: {}]
  $region1: #{tile.9} parent=0
    #allocation0 [shape = 'u8[131072]{0}', space=vmem, size = 0x20000, scoped, tag = 'scoped mem for input reshape']
    %s3 = sshllo.u32 0, 4
    %s4 = smul.addr 4, 31
    %s5 = scalar_lea.vmem %s0, %s4
    %v6 = vld [vmem:[%s5] sm:%s3]
    %s7 = scalar_lea.vmem [#allocation0], 248
    %8 = vst [vmem:[%s7] sm:%s3] %v6
    %s9 = smul.addr 4, 30
    %s10 = scalar_lea.vmem %s0, %s9
    %v11 = vld [vmem:[%s10] sm:%s3]
    %s12 = scalar_lea.vmem [#allocation0], 240
    %13 = vst [vmem:[%s12] sm:%s3] %v11
    %s14 = smul.addr 4, 29
    %s15 = scalar_lea.vmem %s0, %s14
    %v16 = vld [vmem:[%s15] sm:%s3]
    %s17 = scalar_lea.vmem [#allocation0], 232
    %18 = vst [vmem:[%s17] sm:%s3] %v16
    %s19 = smul.addr 4, 28
    %s20 = scalar_lea.vmem %s0, %s19
    %v21 = vld [vmem:[%s20] sm:%s3]
    %s22 = scalar_lea.vmem [#allocation0], 224
    %23 = vst [vmem:[%s22] sm:%s3] %v21
    %s24 = smul.addr 4, 27
    %s25 = scalar_lea.vmem %s0, %s24
    %v26 = vld [vmem:[%s25] sm:%s3]
    %s27 = scalar_lea.vmem [#allocation0], 216
    %28 = vst [vmem:[%s27] sm:%s3] %v26
    %s29 = smul.addr 4, 26
    %s30 = scalar_lea.vmem %s0, %s29
    %v31 = vld [vmem:[%s30] sm:%s3]
    %s32 = scalar_lea.vmem [#allocation0], 208
    %33 = vst [vmem:[%s32] sm:%s3] %v31
    %s34 = smul.addr 4, 25
    %s35 = scalar_lea.vmem %s0, %s34
    %v36 = vld [vmem:[%s35] sm:%s3]
    %s37 = scalar_lea.vmem [#allocation0], 200
    %38 = vst [vmem:[%s37] sm:%s3] %v36
    %s39 = smul.addr 4, 24
    %s40 = scalar_lea.vmem %s0, %s39
    %v41 = vld [vmem:[%s40] sm:%s3]
    %s42 = scalar_lea.vmem [#allocation0], 192
    %43 = vst [vmem:[%s42] sm:%s3] %v41
    %s44 = smul.addr 4, 23
    %s45 = scalar_lea.vmem %s0, %s44
    %v46 = vld [vmem:[%s45] sm:%s3]
    %s47 = scalar_lea.vmem [#allocation0], 184
    %48 = vst [vmem:[%s47] sm:%s3] %v46
    %s49 = smul.addr 4, 22
    %s50 = scalar_lea.vmem %s0, %s49
    %v51 = vld [vmem:[%s50] sm:%s3]
    %s52 = scalar_lea.vmem [#allocation0], 176
    %53 = vst [vmem:[%s52] sm:%s3] %v51
    %s54 = smul.addr 4, 21
    %s55 = scalar_lea.vmem %s0, %s54
    %v56 = vld [vmem:[%s55] sm:%s3]
    %s57 = scalar_lea.vmem [#allocation0], 168
    %58 = vst [vmem:[%s57] sm:%s3] %v56
    %s59 = smul.addr 4, 20
    %s60 = scalar_lea.vmem %s0, %s59
    %v61 = vld [vmem:[%s60] sm:%s3]
    %s62 = scalar_lea.vmem [#allocation0], 160
    %63 = vst [vmem:[%s62] sm:%s3] %v61
    %s64 = smul.addr 4, 19
    %s65 = scalar_lea.vmem %s0, %s64
    %v66 = vld [vmem:[%s65] sm:%s3]
    %s67 = scalar_lea.vmem [#allocation0], 152
    %68 = vst [vmem:[%s67] sm:%s3] %v66
    %s69 = smul.addr 4, 18
    %s70 = scalar_lea.vmem %s0, %s69
    %v71 = vld [vmem:[%s70] sm:%s3]
    %s72 = scalar_lea.vmem [#allocation0], 144
    %73 = vst [vmem:[%s72] sm:%s3] %v71
    %s74 = smul.addr 4, 17
    %s75 = scalar_lea.vmem %s0, %s74
    %v76 = vld [vmem:[%s75] sm:%s3]
    %s77 = scalar_lea.vmem [#allocation0], 136
    %78 = vst [vmem:[%s77] sm:%s3] %v76
    %s79 = smul.addr 4, 16
    %s80 = scalar_lea.vmem %s0, %s79
    %v81 = vld [vmem:[%s80] sm:%s3]
    %s82 = scalar_lea.vmem [#allocation0], 128
    %83 = vst [vmem:[%s82] sm:%s3] %v81
    %s84 = smul.addr 4, 15
    %s85 = scalar_lea.vmem %s0, %s84
    %v86 = vld [vmem:[%s85] sm:%s3]
    %s87 = scalar_lea.vmem [#allocation0], 120
    %88 = vst [vmem:[%s87] sm:%s3] %v86
    %s89 = smul.addr 4, 14
    %s90 = scalar_lea.vmem %s0, %s89
    %v91 = vld [vmem:[%s90] sm:%s3]
    %s92 = scalar_lea.vmem [#allocation0], 112
    %93 = vst [vmem:[%s92] sm:%s3] %v91
    %s94 = smul.addr 4, 13
    %s95 = scalar_lea.vmem %s0, %s94
    %v96 = vld [vmem:[%s95] sm:%s3]
    %s97 = scalar_lea.vmem [#allocation0], 104
    %98 = vst [vmem:[%s97] sm:%s3] %v96
    %s99 = smul.addr 4, 12
    %s100 = scalar_lea.vmem %s0, %s99
    %v101 = vld [vmem:[%s100] sm:%s3]
    %s102 = scalar_lea.vmem [#allocation0], 96
    %103 = vst [vmem:[%s102] sm:%s3] %v101
    %s104 = smul.addr 4, 11
    %s105 = scalar_lea.vmem %s0, %s104
    %v106 = vld [vmem:[%s105] sm:%s3]
    %s107 = scalar_lea.vmem [#allocation0], 88
    %108 = vst [vmem:[%s107] sm:%s3] %v106
    %s109 = smul.addr 4, 10
    %s110 = scalar_lea.vmem %s0, %s109
    %v111 = vld [vmem:[%s110] sm:%s3]
    %s112 = scalar_lea.vmem [#allocation0], 80
    %113 = vst [vmem:[%s112] sm:%s3] %v111
    %s114 = smul.addr 4, 9
    %s115 = scalar_lea.vmem %s0, %s114
    %v116 = vld [vmem:[%s115] sm:%s3]
    %s117 = scalar_lea.vmem [#allocation0], 72
    %118 = vst [vmem:[%s117] sm:%s3] %v116
    %s119 = smul.addr 4, 8
    %s120 = scalar_lea.vmem %s0, %s119
    %v121 = vld [vmem:[%s120] sm:%s3]
    %s122 = scalar_lea.vmem [#allocation0], 64
    %123 = vst [vmem:[%s122] sm:%s3] %v121
    %s124 = smul.addr 4, 7
    %s125 = scalar_lea.vmem %s0, %s124
    %v126 = vld [vmem:[%s125] sm:%s3]
    %s127 = scalar_lea.vmem [#allocation0], 56
    %128 = vst [vmem:[%s127] sm:%s3] %v126
    %s129 = smul.addr 4, 6
    %s130 = scalar_lea.vmem %s0, %s129
    %v131 = vld [vmem:[%s130] sm:%s3]
    %s132 = scalar_lea.vmem [#allocation0], 48
    %133 = vst [vmem:[%s132] sm:%s3] %v131
    %s134 = smul.addr 4, 5
    %s135 = scalar_lea.vmem %s0, %s134
    %v136 = vld [vmem:[%s135] sm:%s3]
    %s137 = scalar_lea.vmem [#allocation0], 40
    %138 = vst [vmem:[%s137] sm:%s3] %v136
    %s139 = smul.addr 4, 4
    %s140 = scalar_lea.vmem %s0, %s139
    %v141 = vld [vmem:[%s140] sm:%s3]
    %s142 = scalar_lea.vmem [#allocation0], 32
    %143 = vst [vmem:[%s142] sm:%s3] %v141
    %s144 = smul.addr 4, 3
    %s145 = scalar_lea.vmem %s0, %s144
    %v146 = vld [vmem:[%s145] sm:%s3]
    %s147 = scalar_lea.vmem [#allocation0], 24
    %148 = vst [vmem:[%s147] sm:%s3] %v146
    %s149 = smul.addr 4, 2
    %s150 = scalar_lea.vmem %s0, %s149
    %v151 = vld [vmem:[%s150] sm:%s3]
    %s152 = scalar_lea.vmem [#allocation0], 16
    %153 = vst [vmem:[%s152] sm:%s3] %v151
    %s154 = scalar_lea.vmem %s0, 4
    %v155 = vld [vmem:[%s154] sm:%s3]
    %s156 = scalar_lea.vmem [#allocation0], 8
    %157 = vst [vmem:[%s156] sm:%s3] %v155
    %v158 = vld [vmem:[%s0] sm:%s3]
    %159 = vst [vmem:[#allocation0] sm:%s3] %v158
    %v160 = vld [vmem:[#allocation0] ss:$8 sm:$0xf]
    %v161 = vld [vmem:[#allocation0] ss:$8 sm:$0xf0]
    %vm162 = vcmask 1047556
    %v163 = vsel %vm162, %v161, %v160
    %vm164 = vcmask 261120
    %165 = vst.msk [vmem:[%s1] sm:$0xff] %vm164, %v163
    %s166 = scalar_lea.vmem [#allocation0], 64
    %v167 = vld [vmem:[%s166] ss:$8 sm:$0xf]
    %s168 = scalar_lea.vmem [#allocation0], 64
    %v169 = vld [vmem:[%s168] ss:$8 sm:$0xf0]
    %vm170 = vcmask 1047556
    %v171 = vsel %vm170, %v169, %v167
    %vm172 = vcmask 261120
    %s173 = scalar_lea.vmem %s1, 8
    %174 = vst.msk [vmem:[%s173] sm:$0xff] %vm172, %v171
    %s175 = scalar_lea.vmem [#allocation0], 128
    %v176 = vld [vmem:[%s175] ss:$8 sm:$0xf]
    %s177 = scalar_lea.vmem [#allocation0], 128
    %v178 = vld [vmem:[%s177] ss:$8 sm:$0xf0]
    %vm179 = vcmask 1047556
    %v180 = vsel %vm179, %v178, %v176
    %vm181 = vcmask 261120
    %s182 = scalar_lea.vmem %s1, 16
    %183 = vst.msk [vmem:[%s182] sm:$0xff] %vm181, %v180
    %s184 = scalar_lea.vmem [#allocation0], 192
    %v185 = vld [vmem:[%s184] ss:$8 sm:$0xf]
    %s186 = scalar_lea.vmem [#allocation0], 192
    %v187 = vld [vmem:[%s186] ss:$8 sm:$0xf0]
    %vm188 = vcmask 1047556
    %v189 = vsel %vm188, %v187, %v185
    %vm190 = vcmask 261120
    %s191 = scalar_lea.vmem %s1, 24
    %192 = vst.msk [vmem:[%s191] sm:$0xff] %vm190, %v189
    %s193 = scalar_lea.vmem [#allocation0], 3
    %v194 = vld [vmem:[%s193] ss:$8 sm:$0xf]
    %s195 = scalar_lea.vmem [#allocation0], 3
    %v196 = vld [vmem:[%s195] ss:$8 sm:$0xf0]
    %vm197 = vcmask 1047556
    %v198 = vsel %vm197, %v196, %v194
    %199 = vrot.lane.b32.xlu0 %v198, 96
    %v200 = vpop.permute.xlu0 %199
    %vm201 = vcmask 1048320
    %202 = vst.msk [vmem:[%s1] sm:$0xff] %vm201, %v200
    %s203 = scalar_lea.vmem [#allocation0], 67
    %v204 = vld [vmem:[%s203] ss:$8 sm:$0xf]
    %s205 = scalar_lea.vmem [#allocation0], 67
    %v206 = vld [vmem:[%s205] ss:$8 sm:$0xf0]
    %vm207 = vcmask 1047556
    %v208 = vsel %vm207, %v206, %v204
    %209 = vrot.lane.b32.xlu0 %v208, 96
    %v210 = vpop.permute.xlu0 %209
    %vm211 = vcmask 1048320
    %s212 = scalar_lea.vmem %s1, 8
    %213 = vst.msk [vmem:[%s212] sm:$0xff] %vm211, %v210
    %s214 = scalar_lea.vmem [#allocation0], 131
    %v215 = vld [vmem:[%s214] ss:$8 sm:$0xf]
    %s216 = scalar_lea.vmem [#allocation0], 131
    %v217 = vld [vmem:[%s216] ss:$8 sm:$0xf0]
    %vm218 = vcmask 1047556
    %v219 = vsel %vm218, %v217, %v215
    %220 = vrot.lane.b32.xlu0 %v219, 96
    %v221 = vpop.permute.xlu0 %220
    %vm222 = vcmask 1048320
    %s223 = scalar_lea.vmem %s1, 16
    %224 = vst.msk [vmem:[%s223] sm:$0xff] %vm222, %v221
    %s225 = scalar_lea.vmem [#allocation0], 195
    %v226 = vld [vmem:[%s225] ss:$8 sm:$0xf]
    %s227 = scalar_lea.vmem [#allocation0], 195
    %v228 = vld [vmem:[%s227] ss:$8 sm:$0xf0]
    %vm229 = vcmask 1047556
    %v230 = vsel %vm229, %v228, %v226
    %231 = vrot.lane.b32.xlu0 %v230, 96
    %v232 = vpop.permute.xlu0 %231
    %vm233 = vcmask 1048320
    %s234 = scalar_lea.vmem %s1, 24
    %235 = vst.msk [vmem:[%s234] sm:$0xff] %vm233, %v232
    %s236 = scalar_lea.vmem [#allocation0], 2
    %v237 = vld [vmem:[%s236] ss:$8 sm:$0xf]
    %s238 = scalar_lea.vmem [#allocation0], 2
    %v239 = vld [vmem:[%s238] ss:$8 sm:$0xf0]
    %vm240 = vcmask 1047556
    %v241 = vsel %vm240, %v239, %v237
    %242 = vrot.lane.b32.xlu0 %v241, 64
    %v243 = vpop.permute.xlu0 %242
    %vm244 = vcmask 785920
    %245 = vst.msk [vmem:[%s1] sm:$0xff] %vm244, %v243
    %s246 = scalar_lea.vmem [#allocation0], 66
    %v247 = vld [vmem:[%s246] ss:$8 sm:$0xf]
    %s248 = scalar_lea.vmem [#allocation0], 66
    %v249 = vld [vmem:[%s248] ss:$8 sm:$0xf0]
    %vm250 = vcmask 1047556
    %v251 = vsel %vm250, %v249, %v247
    %252 = vrot.lane.b32.xlu0 %v251, 64
    %v253 = vpop.permute.xlu0 %252
    %vm254 = vcmask 785920
    %s255 = scalar_lea.vmem %s1, 8
    %256 = vst.msk [vmem:[%s255] sm:$0xff] %vm254, %v253
    %s257 = scalar_lea.vmem [#allocation0], 130
    %v258 = vld [vmem:[%s257] ss:$8 sm:$0xf]
    %s259 = scalar_lea.vmem [#allocation0], 130
    %v260 = vld [vmem:[%s259] ss:$8 sm:$0xf0]
    %vm261 = vcmask 1047556
    %v262 = vsel %vm261, %v260, %v258
    %263 = vrot.lane.b32.xlu0 %v262, 64
    %v264 = vpop.permute.xlu0 %263
    %vm265 = vcmask 785920
    %s266 = scalar_lea.vmem %s1, 16
    %267 = vst.msk [vmem:[%s266] sm:$0xff] %vm265, %v264
    %s268 = scalar_lea.vmem [#allocation0], 194
    %v269 = vld [vmem:[%s268] ss:$8 sm:$0xf]
    %s270 = scalar_lea.vmem [#allocation0], 194
    %v271 = vld [vmem:[%s270] ss:$8 sm:$0xf0]
    %vm272 = vcmask 1047556
    %v273 = vsel %vm272, %v271, %v269
    %274 = vrot.lane.b32.xlu0 %v273, 64
    %v275 = vpop.permute.xlu0 %274
    %vm276 = vcmask 785920
    %s277 = scalar_lea.vmem %s1, 24
    %278 = vst.msk [vmem:[%s277] sm:$0xff] %vm276, %v275
    %s279 = scalar_lea.vmem [#allocation0], 1
    %v280 = vld [vmem:[%s279] ss:$8 sm:$0xf]
    %s281 = scalar_lea.vmem [#allocation0], 1
    %v282 = vld [vmem:[%s281] ss:$8 sm:$0xf0]
    %vm283 = vcmask 1047556
    %v284 = vsel %vm283, %v282, %v280
    %285 = vrot.lane.b32.xlu0 %v284, 32
    %v286 = vpop.permute.xlu0 %285
    %vm287 = vcmask 523520
    %288 = vst.msk [vmem:[%s1] sm:$0xff] %vm287, %v286
    %s289 = scalar_lea.vmem [#allocation0], 65
    %v290 = vld [vmem:[%s289] ss:$8 sm:$0xf]
    %s291 = scalar_lea.vmem [#allocation0], 65
    %v292 = vld [vmem:[%s291] ss:$8 sm:$0xf0]
    %vm293 = vcmask 1047556
    %v294 = vsel %vm293, %v292, %v290
    %295 = vrot.lane.b32.xlu0 %v294, 32
    %v296 = vpop.permute.xlu0 %295
    %vm297 = vcmask 523520
    %s298 = scalar_lea.vmem %s1, 8
    %299 = vst.msk [vmem:[%s298] sm:$0xff] %vm297, %v296
    %s300 = scalar_lea.vmem [#allocation0], 129
    %v301 = vld [vmem:[%s300] ss:$8 sm:$0xf]
    %s302 = scalar_lea.vmem [#allocation0], 129
    %v303 = vld [vmem:[%s302] ss:$8 sm:$0xf0]
    %vm304 = vcmask 1047556
    %v305 = vsel %vm304, %v303, %v301
    %306 = vrot.lane.b32.xlu0 %v305, 32
    %v307 = vpop.permute.xlu0 %306
    %vm308 = vcmask 523520
    %s309 = scalar_lea.vmem %s1, 16
    %310 = vst.msk [vmem:[%s309] sm:$0xff] %vm308, %v307
    %s311 = scalar_lea.vmem [#allocation0], 193
    %v312 = vld [vmem:[%s311] ss:$8 sm:$0xf]
    %s313 = scalar_lea.vmem [#allocation0], 193
    %v314 = vld [vmem:[%s313] ss:$8 sm:$0xf0]
    %vm315 = vcmask 1047556
    %v316 = vsel %vm315, %v314, %v312
    %317 = vrot.lane.b32.xlu0 %v316, 32
    %v318 = vpop.permute.xlu0 %317
    %vm319 = vcmask 523520
    %s320 = scalar_lea.vmem %s1, 24
    %321 = vst.msk [vmem:[%s320] sm:$0xff] %vm319, %v318

// kernel: decoder_layer_forward.1
$region0: #{decoder_layer_forward.1}
  #allocation0 [shape = 'u32[]', space=smem, size = 0x4, offset = 0x4, fixed_abs, tag = 'smem constant byte address 0x4 - core index']
  #allocation1 [shape = 'u32[144,128]{1,0:T(1,128)}', space=vmem, size = 0x12000, scoped, tag = 'internal scratch']
  %s0 = inlined_call_operand.vmem [shape: f32[32,32], index: 0, kind: input, shape index: {}]
  %s1 = inlined_call_operand.vmem [shape: f32[32,32], index: 1, kind: input, shape index: {}]
  %s2 = inlined_call_operand.vmem [shape: f32[32,128], index: 2, kind: input, shape index: {}]
  %s3 = inlined_call_operand.vmem [shape: f32[65,64], index: 3, kind: input, shape index: {}]
  %s4 = inlined_call_operand.vmem [shape: f32[128,32], index: 4, kind: input, shape index: {}]
  %s5 = inlined_call_operand.vmem [shape: f32[8,32], index: 5, kind: input, shape index: {}]
  %s6 = inlined_call_operand.vmem [shape: f32[224,128], index: 6, kind: input, shape index: {}]
  %s7 = inlined_call_operand.vmem [shape: f32[256,32], index: 7, kind: input, shape index: {}]
  %s8 = inlined_call_operand.vmem [shape: f32[48,32], index: 8, kind: output, shape index: {}]
  %s9 = sld [smem:[#allocation0]]
  $region42: #{decoder_layer_forward.1} parent=0
    _
  %s11 = ssub.s32 1, %s9
  %s12 = scalar_select 0, %s11, %s9
  // Predicated region
  $region2: #{decoder_layer_forward.1} parent=0 // pred_check
    _
  $region3: #{decoder_layer_forward.1} parent=0 // pred_check_branch
    %14 = sbr.rel (0) target = $region5
  $region4: #{decoder_layer_forward.1} parent=0 // pred_region
    _
  $region5: #{decoder_layer_forward.1} parent=0 // pred_fallthru
    _
  // Predicated region
  $region6: #{decoder_layer_forward.1} parent=0 // pred_check
    _
  $region7: #{decoder_layer_forward.1} parent=0 // pred_check_branch
    %16 = sbr.rel (0) target = $region9
  $region8: #{decoder_layer_forward.1} parent=0 // pred_region
    _
  $region9: #{decoder_layer_forward.1} parent=0 // pred_fallthru
    _
  // Predicated region
  $region10: #{decoder_layer_forward.1} parent=0 // pred_check
    _
  $region11: #{decoder_layer_forward.1} parent=0 // pred_check_branch
    %18 = sbr.rel (0) target = $region13
  $region12: #{decoder_layer_forward.1} parent=0 // pred_region
    _
  $region13: #{decoder_layer_forward.1} parent=0 // pred_fallthru
    _
  // Predicated region
  $region14: #{decoder_layer_forward.1} parent=0 // pred_check
    _
  $region15: #{decoder_layer_forward.1} parent=0 // pred_check_branch
    %20 = sbr.rel (0) target = $region17
  $region16: #{decoder_layer_forward.1} parent=0 // pred_region
    _
  $region17: #{decoder_layer_forward.1} parent=0 // pred_fallthru
    _
  // Predicated region
  $region18: #{decoder_layer_forward.1} parent=0 // pred_check
    _
  $region19: #{decoder_layer_forward.1} parent=0 // pred_check_branch
    %22 = sbr.rel (0) target = $region21
  $region20: #{decoder_layer_forward.1} parent=0 // pred_region
    _
  $region21: #{decoder_layer_forward.1} parent=0 // pred_fallthru
    _
  // Predicated region
  $region22: #{decoder_layer_forward.1} parent=0 // pred_check
    _
  $region23: #{decoder_layer_forward.1} parent=0 // pred_check_branch
    %24 = sbr.rel (0) target = $region25
  $region24: #{decoder_layer_forward.1} parent=0 // pred_region
    _
  $region25: #{decoder_layer_forward.1} parent=0 // pred_fallthru
    _
  // Predicated region
  $region26: #{decoder_layer_forward.1} parent=0 // pred_check
    _
  $region27: #{decoder_layer_forward.1} parent=0 // pred_check_branch
    %26 = sbr.rel (0) target = $region29
  $region28: #{decoder_layer_forward.1} parent=0 // pred_region
    _
  $region29: #{decoder_layer_forward.1} parent=0 // pred_fallthru
    _
  // Predicated region
  $region30: #{decoder_layer_forward.1} parent=0 // pred_check
    _
  $region31: #{decoder_layer_forward.1} parent=0 // pred_check_branch
    %28 = sbr.rel (0) target = $region33
  $region32: #{decoder_layer_forward.1} parent=0 // pred_region
    _
  $region33: #{decoder_layer_forward.1} parent=0 // pred_fallthru
    _
  %v29 = vld [vmem:[%s0] sm:$0xff]
  %v30 = vld [vmem:[%s0 + $0x8] sm:$0xff]
  %v31 = vld [vmem:[%s0 + $0x10] sm:$0xff]
  %v32 = vld [vmem:[%s0 + $0x18] sm:$0xff]
  %v33 = vld [vmem:[%s1] sm:$0xff]
  %v34 = vld [vmem:[%s1 + $0x8] sm:$0xff]
  %v35 = vld [vmem:[%s1 + $0x10] sm:$0xff]
  %v36 = vld [vmem:[%s1 + $0x18] sm:$0xff]
  %v37 = vld [vmem:[%s2] sm:$0xff]
  %v38 = vld [vmem:[%s2 + $0x8] sm:$0xff]
  %v39 = vld [vmem:[%s2 + $0x10] sm:$0xff]
  %v40 = vld [vmem:[%s2 + $0x18] sm:$0xff]
  %v41 = vld [vmem:[%s3] sm:$0xff]
  %v42 = vld [vmem:[%s3 + $0x8] sm:$0xff]
  %v43 = vld [vmem:[%s3 + $0x10] sm:$0xff]
  %v44 = vld [vmem:[%s3 + $0x18] sm:$0xff]
  %v45 = vld [vmem:[%s3 + $0x20] sm:$0xff]
  %v46 = vld [vmem:[%s3 + $0x28] sm:$0xff]
  %v47 = vld [vmem:[%s3 + $0x30] sm:$0xff]
  %v48 = vld [vmem:[%s3 + $0x38] sm:$0xff]
  %v49 = vld [vmem:[%s3 + $0x40] sm:$0x1]
  %v50 = vld [vmem:[%s4] sm:$0xff]
  %v51 = vld [vmem:[%s4 + $0x8] sm:$0xff]
  %v52 = vld [vmem:[%s4 + $0x10] sm:$0xff]
  %v53 = vld [vmem:[%s4 + $0x18] sm:$0xff]
  %v54 = vld [vmem:[%s4 + $0x20] sm:$0xff]
  %v55 = vld [vmem:[%s4 + $0x28] sm:$0xff]
  %v56 = vld [vmem:[%s4 + $0x30] sm:$0xff]
  %v57 = vld [vmem:[%s4 + $0x38] sm:$0xff]
  %v58 = vld [vmem:[%s4 + $0x40] sm:$0xff]
  %v59 = vld [vmem:[%s4 + $0x48] sm:$0xff]
  %v60 = vld [vmem:[%s4 + $0x50] sm:$0xff]
  %v61 = vld [vmem:[%s4 + $0x58] sm:$0xff]
  %v62 = vld [vmem:[%s4 + $0x60] sm:$0xff]
  %v63 = vld [vmem:[%s4 + $0x68] sm:$0xff]
  %v64 = vld [vmem:[%s4 + $0x70] sm:$0xff]
  %v65 = vld [vmem:[%s4 + $0x78] sm:$0xff]
  %v66 = vld [vmem:[%s5] sm:$0xff]
  %v67 = vld [vmem:[%s6] sm:$0xff]
  %v68 = vld [vmem:[%s6 + $0x8] sm:$0xff]
  %v69 = vld [vmem:[%s6 + $0x10] sm:$0xff]
  %v70 = vld [vmem:[%s6 + $0x18] sm:$0xff]
  %v71 = vld [vmem:[%s6 + $0x20] sm:$0xff]
  %v72 = vld [vmem:[%s6 + $0x28] sm:$0xff]
  %v73 = vld [vmem:[%s6 + $0x30] sm:$0xff]
  %v74 = vld [vmem:[%s6 + $0x38] sm:$0xff]
  %v75 = vld [vmem:[%s6 + $0x40] sm:$0xff]
  %v76 = vld [vmem:[%s6 + $0x48] sm:$0xff]
  %v77 = vld [vmem:[%s6 + $0x50] sm:$0xff]
  %v78 = vld [vmem:[%s6 + $0x58] sm:$0xff]
  %v79 = vld [vmem:[%s6 + $0x60] sm:$0xff]
  %v80 = vld [vmem:[%s6 + $0x68] sm:$0xff]
  %v81 = vld [vmem:[%s6 + $0x70] sm:$0xff]
  %v82 = vld [vmem:[%s6 + $0x78] sm:$0xff]
  %v83 = vld [vmem:[%s6 + $0x80] sm:$0xff]
  %v84 = vld [vmem:[%s6 + $0x88] sm:$0xff]
  %v85 = vld [vmem:[%s6 + $0x90] sm:$0xff]
  %v86 = vld [vmem:[%s6 + $0x98] sm:$0xff]
  %v87 = vld [vmem:[%s6 + $0xa0] sm:$0xff]
  %v88 = vld [vmem:[%s6 + $0xa8] sm:$0xff]
  %v89 = vld [vmem:[%s6 + $0xb0] sm:$0xff]
  %v90 = vld [vmem:[%s6 + $0xb8] sm:$0xff]
  %v91 = vld [vmem:[%s6 + $0xc0] sm:$0xff]
  %v92 = vld [vmem:[%s6 + $0xc8] sm:$0xff]
  %v93 = vld [vmem:[%s6 + $0xd0] sm:$0xff]
  %v94 = vld [vmem:[%s6 + $0xd8] sm:$0xff]
  %v95 = vld [vmem:[%s7] sm:$0xff]
  %v96 = vld [vmem:[%s7 + $0x8] sm:$0xff]
  %v97 = vld [vmem:[%s7 + $0x10] sm:$0xff]
  %v98 = vld [vmem:[%s7 + $0x18] sm:$0xff]
  %v99 = vld [vmem:[%s7 + $0x20] sm:$0xff]
  %v100 = vld [vmem:[%s7 + $0x28] sm:$0xff]
  %v101 = vld [vmem:[%s7 + $0x30] sm:$0xff]
  %v102 = vld [vmem:[%s7 + $0x38] sm:$0xff]
  %v103 = vld [vmem:[%s7 + $0x40] sm:$0xff]
  %v104 = vld [vmem:[%s7 + $0x48] sm:$0xff]
  %v105 = vld [vmem:[%s7 + $0x50] sm:$0xff]
  %v106 = vld [vmem:[%s7 + $0x58] sm:$0xff]
  %v107 = vld [vmem:[%s7 + $0x60] sm:$0xff]
  %v108 = vld [vmem:[%s7 + $0x68] sm:$0xff]
  %v109 = vld [vmem:[%s7 + $0x70] sm:$0xff]
  %v110 = vld [vmem:[%s7 + $0x78] sm:$0xff]
  %v111 = vld [vmem:[%s7 + $0x80] sm:$0xff]
  %v112 = vld [vmem:[%s7 + $0x88] sm:$0xff]
  %v113 = vld [vmem:[%s7 + $0x90] sm:$0xff]
  %v114 = vld [vmem:[%s7 + $0x98] sm:$0xff]
  %v115 = vld [vmem:[%s7 + $0xa0] sm:$0xff]
  %v116 = vld [vmem:[%s7 + $0xa8] sm:$0xff]
  %v117 = vld [vmem:[%s7 + $0xb0] sm:$0xff]
  %v118 = vld [vmem:[%s7 + $0xb8] sm:$0xff]
  %v119 = vld [vmem:[%s7 + $0xc0] sm:$0xff]
  %v120 = vld [vmem:[%s7 + $0xc8] sm:$0xff]
  %v121 = vld [vmem:[%s7 + $0xd0] sm:$0xff]
  %v122 = vld [vmem:[%s7 + $0xd8] sm:$0xff]
  %v123 = vld [vmem:[%s7 + $0xe0] sm:$0xff]
  %v124 = vld [vmem:[%s7 + $0xe8] sm:$0xff]
  %v125 = vld [vmem:[%s7 + $0xf0] sm:$0xff]
  %v126 = vld [vmem:[%s7 + $0xf8] sm:$0xff]
  %vm127 = vcmask 261120
  %v128 = vsel %vm127, %v29, 0.0
  %129 = vadd.xlane.f32.xlu0 %v128
  %v130 = vpop.xlane.xlu0 %129
  %v131 = vsel %vm127, %v30, 0.0
  %132 = vadd.xlane.f32.xlu0 %v131
  %v133 = vpop.xlane.xlu0 %132
  %v134 = vsel %vm127, %v31, 0.0
  %135 = vadd.xlane.f32.xlu0 %v134
  %v136 = vpop.xlane.xlu0 %135
  %v137 = vsel %vm127, %v32, 0.0
  %138 = vadd.xlane.f32.xlu0 %v137
  %v139 = vpop.xlane.xlu0 %138
  %v140 = vrcp.pop 32.0
  %v141 = vmul.f32 %v130, %v140
  %v142 = vmul.f32 %v133, %v140
  %v143 = vmul.f32 %v136, %v140
  %v144 = vmul.f32 %v139, %v140
  %v145 = vsub.f32 %v29, %v141
  %v146 = vsub.f32 %v30, %v142
  %v147 = vsub.f32 %v31, %v143
  %v148 = vsub.f32 %v32, %v144
  %v149 = vmul.f32 %v145, %v145
  %v150 = vmul.f32 %v146, %v146
  %v151 = vmul.f32 %v147, %v147
  %v152 = vmul.f32 %v148, %v148
  %v153 = vsel %vm127, %v149, 0.0
  %154 = vadd.xlane.f32.xlu0 %v153
  %v155 = vpop.xlane.xlu0 %154
  %v156 = vsel %vm127, %v150, 0.0
  %157 = vadd.xlane.f32.xlu0 %v156
  %v158 = vpop.xlane.xlu0 %157
  %v159 = vsel %vm127, %v151, 0.0
  %160 = vadd.xlane.f32.xlu0 %v159
  %v161 = vpop.xlane.xlu0 %160
  %v162 = vsel %vm127, %v152, 0.0
  %163 = vadd.xlane.f32.xlu0 %v162
  %v164 = vpop.xlane.xlu0 %163
  %v165 = vmul.f32 %v155, %v140
  %v166 = vmul.f32 %v158, %v140
  %v167 = vmul.f32 %v161, %v140
  %v168 = vmul.f32 %v164, %v140
  %v169 = vadd.f32 %v165, 1e-05
  %v170 = vadd.f32 %v166, 1e-05
  %v171 = vadd.f32 %v167, 1e-05
  %v172 = vadd.f32 %v168, 1e-05
  %v173 = vrsqrt.pop %v169
  %v174 = vrsqrt.pop %v170
  %v175 = vrsqrt.pop %v171
  %v176 = vrsqrt.pop %v172
  %v177 = vmul.f32 %v145, %v173
  %v178 = vmul.f32 %v146, %v174
  %v179 = vmul.f32 %v147, %v175
  %v180 = vmul.f32 %v148, %v176
  %v181 = vlaneseq
  %v182 = vshrl.u32 %v181, 7
  %v183 = vsub.s32 0, %v182
  %v184 = vrot.slane %v66, %v183
  %v185 = vmul.f32 %v177, %v184
  %v186 = vmul.f32 %v178, %v184
  %v187 = vmul.f32 %v179, %v184
  %v188 = vmul.f32 %v180, %v184
  %v189 = vlaneseq
  %v190 = vshrl.u32 %v189, 7
  %v191 = vsub.s32 1, %v190
  %v192 = vrot.slane %v66, %v191
  %v193 = vadd.f32 %v185, %v192
  %v194 = vadd.f32 %v186, %v192
  %v195 = vadd.f32 %v187, %v192
  %v196 = vadd.f32 %v188, %v192
  %v198 = vsel %vm127, %v193, 0
  %v201 = vsel %vm127, %v194, 0
  %v204 = vsel %vm127, %v195, 0
  %v207 = vsel %vm127, %v196, 0
  %v210 = vsel %vm127, %v33, 0
  %v213 = vsel %vm127, %v34, 0
  %v216 = vsel %vm127, %v35, 0
  %v219 = vsel %vm127, %v36, 0
  %221 = vmatprep.subr.mxu0 0.0
  %222 = vmatpush1.msra.mxu0 %v41
  %223 = vmatprep.subr.mxu0 0.0
  %224 = vmatpush1.msra.mxu0 %v42
  %225 = vmatprep.subr.mxu0 0.0
  %226 = vmatpush1.msra.mxu0 %v43
  %227 = vmatprep.subr.mxu0 0.0
  %228 = vmatpush1.msra.mxu0 %v44
  %229 = vmatprep.subr.mxu0 0.0
  %230 = vmatpush1.msra.mxu0 0.0
  %231 = vmatprep.subr.mxu0 0.0
  %232 = vmatpush1.msra.mxu0 0.0
  %233 = vmatprep.subr.mxu0 0.0
  %234 = vmatpush1.msra.mxu0 0.0
  %235 = vmatprep.subr.mxu0 0.0
  %236 = vmatpush1.msra.mxu0 0.0
  %237 = vmatprep.subr.mxu0 0.0
  %238 = vmatpush1.msra.mxu0 0.0
  %239 = vmatprep.subr.mxu0 0.0
  %240 = vmatpush1.msra.mxu0 0.0
  %241 = vmatprep.subr.mxu0 0.0
  %242 = vmatpush1.msra.mxu0 0.0
  %243 = vmatprep.subr.mxu0 0.0
  %244 = vmatpush1.msra.mxu0 0.0
  %245 = vmatprep.subr.mxu0 0.0
  %246 = vmatpush1.msra.mxu0 0.0
  %247 = vmatprep.subr.mxu0 0.0
  %248 = vmatpush1.msra.mxu0 0.0
  %249 = vmatprep.subr.mxu0 0.0
  %250 = vmatpush1.msra.mxu0 0.0
  %251 = vmatprep.subr.mxu0 0.0
  %252 = vmatpush1.msra.mxu0 0.0
  %253 = vmatprep.subr.mxu0 0.0
  %254 = vmatpush1.msra.mxu0 0.0
  %255 = vmatprep.subr.mxu0 0.0
  %256 = vmatpush1.msra.mxu0 0.0
  %257 = vmatprep.subr.mxu0 0.0
  %258 = vmatpush1.msra.mxu0 0.0
  %259 = vmatprep.subr.mxu0 0.0
  %260 = vmatpush1.msra.mxu0 0.0
  %261 = vmatprep.subr.mxu0 0.0
  %262 = vmatpush1.msra.mxu0 0.0
  %263 = vmatprep.subr.mxu0 0.0
  %264 = vmatpush1.msra.mxu0 0.0
  %265 = vmatprep.subr.mxu0 0.0
  %266 = vmatpush1.msra.mxu0 0.0
  %267 = vmatprep.subr.mxu0 0.0
  %268 = vmatpush1.msra.mxu0 0.0
  %269 = vmatprep.subr.mxu0 0.0
  %270 = vmatpush1.msra.mxu0 0.0
  %271 = vmatprep.subr.mxu0 0.0
  %272 = vmatpush1.msra.mxu0 0.0
  %273 = vmatprep.subr.mxu0 0.0
  %274 = vmatpush1.msra.mxu0 0.0
  %275 = vmatprep.subr.mxu0 0.0
  %276 = vmatpush1.msra.mxu0 0.0
  %277 = vmatprep.subr.mxu0 0.0
  %278 = vmatpush1.msra.mxu0 0.0
  %279 = vmatprep.subr.mxu0 0.0
  %280 = vmatpush1.msra.mxu0 0.0
  %281 = vmatprep.subr.mxu0 0.0
  %282 = vmatpush1.msra.mxu0 0.0
  %283 = vmatprep.subr.mxu0 0.0
  %284 = vmatpush1.msra.mxu0 0.0
  %285 = vmatprep.mubr.f32.mxu0 0.0
  %286 = vmatmul.mubr.f32.gmra.mrb[0].mxu0 %v198
  %v287 = vpop.f32.mrb[0].mxu0
  %v288 = vadd.f32 0.0, %v287
  %v289 = vpop.f32.mrb[0].mxu0
  %290 = vmatprep.mubr.f32.mxu0 0.0
  %291 = vmatmul.mubr.f32.gmra.mrb[0].mxu0 %v201
  %v292 = vpop.f32.mrb[0].mxu0
  %v293 = vadd.f32 0.0, %v292
  %v294 = vpop.f32.mrb[0].mxu0
  %295 = vmatprep.mubr.f32.mxu0 0.0
  %296 = vmatmul.mubr.f32.gmra.mrb[0].mxu0 %v204
  %v297 = vpop.f32.mrb[0].mxu0
  %v298 = vadd.f32 0.0, %v297
  %v299 = vpop.f32.mrb[0].mxu0
  %300 = vmatprep.mubr.f32.mxu0 0.0
  %301 = vmatmul.mubr.f32.gmra.mrb[0].mxu0 %v207
  %v302 = vpop.f32.mrb[0].mxu0
  %v303 = vadd.f32 0.0, %v302
  %v304 = vpop.f32.mrb[0].mxu0
  %305 = vmatprep.mubr.f32.mxu0 0.0
  %306 = vmatmul.mubr.f32.gmra.mrb[0].mxu0 %v210
  %v307 = vpop.f32.mrb[0].mxu0
  %v308 = vadd.f32 0.0, %v307
  %v309 = vpop.f32.mrb[0].mxu0
  %310 = vmatprep.mubr.f32.mxu0 0.0
  %311 = vmatmul.mubr.f32.gmra.mrb[0].mxu0 %v213
  %v312 = vpop.f32.mrb[0].mxu0
  %v313 = vadd.f32 0.0, %v312
  %v314 = vpop.f32.mrb[0].mxu0
  %315 = vmatprep.mubr.f32.mxu0 0.0
  %316 = vmatmul.mubr.f32.gmra.mrb[0].mxu0 %v216
  %v317 = vpop.f32.mrb[0].mxu0
  %v318 = vadd.f32 0.0, %v317
  %v319 = vpop.f32.mrb[0].mxu0
  %320 = vmatprep.mubr.f32.mxu0 0.0
  %321 = vmatmul.mubr.f32.gmra.mrb[0].mxu0 %v219
  %v322 = vpop.f32.mrb[0].mxu0
  %v323 = vadd.f32 0.0, %v322
  %v324 = vpop.f32.mrb[0].mxu0
  %325 = vdwg.mxu0
  %v326 = vlaneseq
  %v327 = vshrl.u32 %v326, 7
  %v328 = vsub.s32 4, %v327
  %v329 = vrot.slane %v66, %v328
  %v330 = vadd.f32 %v288, %v329
  %v331 = vadd.f32 %v293, %v329
  %v332 = vadd.f32 %v298, %v329
  %v333 = vadd.f32 %v303, %v329
  %v334 = vlaneseq
  %v335 = vshrl.u32 %v334, 7
  %v336 = vsub.s32 5, %v335
  %v337 = vrot.slane %v66, %v336
  %339 = vrot.lane.b32.xlu0 %v337, 32
  %v340 = vpop.permute.xlu0 %339
  %v342 = vadd.f32 %v308, %v340
  %v343 = vadd.f32 %v313, %v340
  %v344 = vadd.f32 %v318, %v340
  %v345 = vadd.f32 %v323, %v340
  %v347 = vsel %vm127, %v50, 0
  %v350 = vsel %vm127, %v51, 0
  %v353 = vsel %vm127, %v52, 0
  %v356 = vsel %vm127, %v53, 0
  %358 = vmatprep.subr.mxu0 0.0
  %359 = vmatpush1.msra.mxu0 %v37
  %360 = vmatprep.subr.mxu0 0.0
  %361 = vmatpush1.msra.mxu0 %v38
  %362 = vmatprep.subr.mxu0 0.0
  %363 = vmatpush1.msra.mxu0 %v39
  %364 = vmatprep.subr.mxu0 0.0
  %365 = vmatpush1.msra.mxu0 %v40
  %366 = vmatprep.subr.mxu0 0.0
  %367 = vmatpush1.msra.mxu0 0.0
  %368 = vmatprep.subr.mxu0 0.0
  %369 = vmatpush1.msra.mxu0 0.0
  %370 = vmatprep.subr.mxu0 0.0
  %371 = vmatpush1.msra.mxu0 0.0
  %372 = vmatprep.subr.mxu0 0.0
  %373 = vmatpush1.msra.mxu0 0.0
  %374 = vmatprep.subr.mxu0 0.0
  %375 = vmatpush1.msra.mxu0 0.0
  %376 = vmatprep.subr.mxu0 0.0
  %377 = vmatpush1.msra.mxu0 0.0
  %378 = vmatprep.subr.mxu0 0.0
  %379 = vmatpush1.msra.mxu0 0.0
  %380 = vmatprep.subr.mxu0 0.0
  %381 = vmatpush1.msra.mxu0 0.0
  %382 = vmatprep.subr.mxu0 0.0
  %383 = vmatpush1.msra.mxu0 0.0
  %384 = vmatprep.subr.mxu0 0.0
  %385 = vmatpush1.msra.mxu0 0.0
  %386 = vmatprep.subr.mxu0 0.0
  %387 = vmatpush1.msra.mxu0 0.0
  %388 = vmatprep.subr.mxu0 0.0
  %389 = vmatpush1.msra.mxu0 0.0
  %390 = vmatprep.subr.mxu0 0.0
  %391 = vmatpush1.msra.mxu0 0.0
  %392 = vmatprep.subr.mxu0 0.0
  %393 = vmatpush1.msra.mxu0 0.0
  %394 = vmatprep.subr.mxu0 0.0
  %395 = vmatpush1.msra.mxu0 0.0
  %396 = vmatprep.subr.mxu0 0.0
  %397 = vmatpush1.msra.mxu0 0.0
  %398 = vmatprep.subr.mxu0 0.0
  %399 = vmatpush1.msra.mxu0 0.0
  %400 = vmatprep.subr.mxu0 0.0
  %401 = vmatpush1.msra.mxu0 0.0
  %402 = vmatprep.subr.mxu0 0.0
  %403 = vmatpush1.msra.mxu0 0.0
  %404 = vmatprep.subr.mxu0 0.0
  %405 = vmatpush1.msra.mxu0 0.0
  %406 = vmatprep.subr.mxu0 0.0
  %407 = vmatpush1.msra.mxu0 0.0
  %408 = vmatprep.subr.mxu0 0.0
  %409 = vmatpush1.msra.mxu0 0.0
  %410 = vmatprep.subr.mxu0 0.0
  %411 = vmatpush1.msra.mxu0 0.0
  %412 = vmatprep.subr.mxu0 0.0
  %413 = vmatpush1.msra.mxu0 0.0
  %414 = vmatprep.subr.mxu0 0.0
  %415 = vmatpush1.msra.mxu0 0.0
  %416 = vmatprep.subr.mxu0 0.0
  %417 = vmatpush1.msra.mxu0 0.0
  %418 = vmatprep.subr.mxu0 0.0
  %419 = vmatpush1.msra.mxu0 0.0
  %420 = vmatprep.subr.mxu0 0.0
  %421 = vmatpush1.msra.mxu0 0.0
  %422 = vmatprep.mubr.f32.mxu0 0.0
  %423 = vmatmul.mubr.f32.gmra.mrb[0].mxu0 %v347
  %v424 = vpop.f32.mrb[0].mxu0
  %v425 = vadd.f32 0.0, %v424
  %v426 = vpop.f32.mrb[0].mxu0
  %427 = vmatprep.mubr.f32.mxu0 0.0
  %428 = vmatmul.mubr.f32.gmra.mrb[0].mxu0 %v350
  %v429 = vpop.f32.mrb[0].mxu0
  %v430 = vadd.f32 0.0, %v429
  %v431 = vpop.f32.mrb[0].mxu0
  %432 = vmatprep.mubr.f32.mxu0 0.0
  %433 = vmatmul.mubr.f32.gmra.mrb[0].mxu0 %v353
  %v434 = vpop.f32.mrb[0].mxu0
  %v435 = vadd.f32 0.0, %v434
  %v436 = vpop.f32.mrb[0].mxu0
  %437 = vmatprep.mubr.f32.mxu0 0.0
  %438 = vmatmul.mubr.f32.gmra.mrb[0].mxu0 %v356
  %v439 = vpop.f32.mrb[0].mxu0
  %v440 = vadd.f32 0.0, %v439
  %v441 = vpop.f32.mrb[0].mxu0
  %442 = vdwg.mxu0
  %v443 = vmul.f32 %v425, %v83
  %v444 = vmul.f32 %v430, %v84
  %v445 = vmul.f32 %v435, %v85
  %v446 = vmul.f32 %v440, %v86
  %v447 = vadd.f32 %v443, %v87
  %v448 = vadd.f32 %v444, %v88
  %v449 = vadd.f32 %v445, %v89
  %v450 = vadd.f32 %v446, %v90
  %467 = vrot.lane.b32.xlu0 %v95, 32
  %v468 = vpop.permute.xlu0 %467
  %469 = vrot.lane.b32.xlu0 %v96, 32
  %v470 = vpop.permute.xlu0 %469
  %471 = vrot.lane.b32.xlu0 %v97, 32
  %v472 = vpop.permute.xlu0 %471
  %473 = vrot.lane.b32.xlu0 %v98, 32
  %v474 = vpop.permute.xlu0 %473
  %475 = vrot.lane.b32.xlu0 %v99, 32
  %v476 = vpop.permute.xlu0 %475
  %477 = vrot.lane.b32.xlu0 %v100, 32
  %v478 = vpop.permute.xlu0 %477
  %479 = vrot.lane.b32.xlu0 %v101, 32
  %v480 = vpop.permute.xlu0 %479
  %481 = vrot.lane.b32.xlu0 %v102, 32
  %v482 = vpop.permute.xlu0 %481
  %483 = vrot.lane.b32.xlu0 %v103, 32
  %v484 = vpop.permute.xlu0 %483
  %485 = vrot.lane.b32.xlu0 %v104, 32
  %v486 = vpop.permute.xlu0 %485
  %487 = vrot.lane.b32.xlu0 %v105, 32
  %v488 = vpop.permute.xlu0 %487
  %489 = vrot.lane.b32.xlu0 %v106, 32
  %v490 = vpop.permute.xlu0 %489
  %491 = vrot.lane.b32.xlu0 %v107, 32
  %v492 = vpop.permute.xlu0 %491
  %493 = vrot.lane.b32.xlu0 %v108, 32
  %v494 = vpop.permute.xlu0 %493
  %495 = vrot.lane.b32.xlu0 %v109, 32
  %v496 = vpop.permute.xlu0 %495
  %497 = vrot.lane.b32.xlu0 %v110, 32
  %v498 = vpop.permute.xlu0 %497
  %v515 = vmul.f32 %v342, %v468
  %v516 = vmul.f32 %v343, %v470
  %v517 = vmul.f32 %v344, %v472
  %v518 = vmul.f32 %v345, %v474
  %v519 = vmul.f32 %v342, %v476
  %v520 = vmul.f32 %v343, %v478
  %v521 = vmul.f32 %v344, %v480
  %v522 = vmul.f32 %v345, %v482
  %v523 = vmul.f32 %v342, %v484
  %v524 = vmul.f32 %v343, %v486
  %v525 = vmul.f32 %v344, %v488
  %v526 = vmul.f32 %v345, %v490
  %v527 = vmul.f32 %v342, %v492
  %v528 = vmul.f32 %v343, %v494
  %v529 = vmul.f32 %v344, %v496
  %v530 = vmul.f32 %v345, %v498
  %v532 = vsel %vm127, %v330, 0
  %v535 = vsel %vm127, %v331, 0
  %v538 = vsel %vm127, %v332, 0
  %v541 = vsel %vm127, %v333, 0
  %543 = vmatprep.subr.mxu0 0.0
  %544 = vmatpush1.msra.mxu0 %v447
  %545 = vmatprep.subr.mxu0 0.0
  %546 = vmatpush1.msra.mxu0 %v448
  %547 = vmatprep.subr.mxu0 0.0
  %548 = vmatpush1.msra.mxu0 %v449
  %549 = vmatprep.subr.mxu0 0.0
  %550 = vmatpush1.msra.mxu0 %v450
  %551 = vmatprep.subr.mxu0 0.0
  %552 = vmatpush1.msra.mxu0 0.0
  %553 = vmatprep.subr.mxu0 0.0
  %554 = vmatpush1.msra.mxu0 0.0
  %555 = vmatprep.subr.mxu0 0.0
  %556 = vmatpush1.msra.mxu0 0.0
  %557 = vmatprep.subr.mxu0 0.0
  %558 = vmatpush1.msra.mxu0 0.0
  %559 = vmatprep.subr.mxu0 0.0
  %560 = vmatpush1.msra.mxu0 0.0
  %561 = vmatprep.subr.mxu0 0.0
  %562 = vmatpush1.msra.mxu0 0.0
  %563 = vmatprep.subr.mxu0 0.0
  %564 = vmatpush1.msra.mxu0 0.0
  %565 = vmatprep.subr.mxu0 0.0
  %566 = vmatpush1.msra.mxu0 0.0
  %567 = vmatprep.subr.mxu0 0.0
  %568 = vmatpush1.msra.mxu0 0.0
  %569 = vmatprep.subr.mxu0 0.0
  %570 = vmatpush1.msra.mxu0 0.0
  %571 = vmatprep.subr.mxu0 0.0
  %572 = vmatpush1.msra.mxu0 0.0
  %573 = vmatprep.subr.mxu0 0.0
  %574 = vmatpush1.msra.mxu0 0.0
  %575 = vmatprep.subr.mxu0 0.0
  %576 = vmatpush1.msra.mxu0 0.0
  %577 = vmatprep.subr.mxu0 0.0
  %578 = vmatpush1.msra.mxu0 0.0
  %579 = vmatprep.subr.mxu0 0.0
  %580 = vmatpush1.msra.mxu0 0.0
  %581 = vmatprep.subr.mxu0 0.0
  %582 = vmatpush1.msra.mxu0 0.0
  %583 = vmatprep.subr.mxu0 0.0
  %584 = vmatpush1.msra.mxu0 0.0
  %585 = vmatprep.subr.mxu0 0.0
  %586 = vmatpush1.msra.mxu0 0.0
  %587 = vmatprep.subr.mxu0 0.0
  %588 = vmatpush1.msra.mxu0 0.0
  %589 = vmatprep.subr.mxu0 0.0
  %590 = vmatpush1.msra.mxu0 0.0
  %591 = vmatprep.subr.mxu0 0.0
  %592 = vmatpush1.msra.mxu0 0.0
  %593 = vmatprep.subr.mxu0 0.0
  %594 = vmatpush1.msra.mxu0 0.0
  %595 = vmatprep.subr.mxu0 0.0
  %596 = vmatpush1.msra.mxu0 0.0
  %597 = vmatprep.subr.mxu0 0.0
  %598 = vmatpush1.msra.mxu0 0.0
  %599 = vmatprep.subr.mxu0 0.0
  %600 = vmatpush1.msra.mxu0 0.0
  %601 = vmatprep.subr.mxu0 0.0
  %602 = vmatpush1.msra.mxu0 0.0
  %603 = vmatprep.subr.mxu0 0.0
  %604 = vmatpush1.msra.mxu0 0.0
  %605 = vmatprep.subr.mxu0 0.0
  %606 = vmatpush1.msra.mxu0 0.0
  %607 = vmatprep.mubr.f32.mxu0 0.0
  %608 = vmatmul.mubr.f32.gmra.mrb[0].mxu0 %v532
  %v609 = vpop.f32.mrb[0].mxu0
  %v610 = vadd.f32 0.0, %v609
  %v611 = vpop.f32.mrb[0].mxu0
  %612 = vmatprep.mubr.f32.mxu0 0.0
  %613 = vmatmul.mubr.f32.gmra.mrb[0].mxu0 %v535
  %v614 = vpop.f32.mrb[0].mxu0
  %v615 = vadd.f32 0.0, %v614
  %v616 = vpop.f32.mrb[0].mxu0
  %617 = vmatprep.mubr.f32.mxu0 0.0
  %618 = vmatmul.mubr.f32.gmra.mrb[0].mxu0 %v538
  %v619 = vpop.f32.mrb[0].mxu0
  %v620 = vadd.f32 0.0, %v619
  %v621 = vpop.f32.mrb[0].mxu0
  %622 = vmatprep.mubr.f32.mxu0 0.0
  %623 = vmatmul.mubr.f32.gmra.mrb[0].mxu0 %v541
  %v624 = vpop.f32.mrb[0].mxu0
  %v625 = vadd.f32 0.0, %v624
  %v626 = vpop.f32.mrb[0].mxu0
  %627 = vdwg.mxu0
  %628 = vmax.xlane.f32.xlu0 %v610
  %v629 = vpop.xlane.xlu0 %628
  %630 = vmax.xlane.f32.xlu0 %v615
  %v631 = vpop.xlane.xlu0 %630
  %632 = vmax.xlane.f32.xlu0 %v620
  %v633 = vpop.xlane.xlu0 %632
  %634 = vmax.xlane.f32.xlu0 %v625
  %v635 = vpop.xlane.xlu0 %634
  %v636 = vsub.f32 %v610, %v629
  %v637 = vsub.f32 %v615, %v631
  %v638 = vsub.f32 %v620, %v633
  %v639 = vsub.f32 %v625, %v635
  %v640 = vmul.f32 %v636, 1.442695
  %v641 = vpow.pop %v640
  %v642 = vmul.f32 %v637, 1.442695
  %v643 = vpow.pop %v642
  %v644 = vmul.f32 %v638, 1.442695
  %v645 = vpow.pop %v644
  %v646 = vmul.f32 %v639, 1.442695
  %v647 = vpow.pop %v646
  %648 = vmatprep.subr.mxu0 0.0
  %649 = vmatpush1.msra.mxu0 %v67
  %650 = vmatprep.subr.mxu0 0.0
  %651 = vmatpush1.msra.mxu0 %v68
  %652 = vmatprep.subr.mxu0 0.0
  %653 = vmatpush1.msra.mxu0 %v69
  %654 = vmatprep.subr.mxu0 0.0
  %655 = vmatpush1.msra.mxu0 %v70
  %656 = vmatprep.subr.mxu0 0.0
  %657 = vmatpush1.msra.mxu0 %v71
  %658 = vmatprep.subr.mxu0 0.0
  %659 = vmatpush1.msra.mxu0 %v72
  %660 = vmatprep.subr.mxu0 0.0
  %661 = vmatpush1.msra.mxu0 %v73
  %662 = vmatprep.subr.mxu0 0.0
  %663 = vmatpush1.msra.mxu0 %v74
  %664 = vmatprep.subr.mxu0 0.0
  %665 = vmatpush1.msra.mxu0 %v75
  %666 = vmatprep.subr.mxu0 0.0
  %667 = vmatpush1.msra.mxu0 %v76
  %668 = vmatprep.subr.mxu0 0.0
  %669 = vmatpush1.msra.mxu0 %v77
  %670 = vmatprep.subr.mxu0 0.0
  %671 = vmatpush1.msra.mxu0 %v78
  %672 = vmatprep.subr.mxu0 0.0
  %673 = vmatpush1.msra.mxu0 %v79
  %674 = vmatprep.subr.mxu0 0.0
  %675 = vmatpush1.msra.mxu0 %v80
  %676 = vmatprep.subr.mxu0 0.0
  %677 = vmatpush1.msra.mxu0 %v81
  %678 = vmatprep.subr.mxu0 0.0
  %679 = vmatpush1.msra.mxu0 %v82
  %680 = vmatprep.subr.mxu0 0.0
  %681 = vmatpush1.msra.mxu0 0.0
  %682 = vmatprep.subr.mxu0 0.0
  %683 = vmatpush1.msra.mxu0 0.0
  %684 = vmatprep.subr.mxu0 0.0
  %685 = vmatpush1.msra.mxu0 0.0
  %686 = vmatprep.subr.mxu0 0.0
  %687 = vmatpush1.msra.mxu0 0.0
  %688 = vmatprep.subr.mxu0 0.0
  %689 = vmatpush1.msra.mxu0 0.0
  %690 = vmatprep.subr.mxu0 0.0
  %691 = vmatpush1.msra.mxu0 0.0
  %692 = vmatprep.subr.mxu0 0.0
  %693 = vmatpush1.msra.mxu0 0.0
  %694 = vmatprep.subr.mxu0 0.0
  %695 = vmatpush1.msra.mxu0 0.0
  %696 = vmatprep.subr.mxu0 0.0
  %697 = vmatpush1.msra.mxu0 0.0
  %698 = vmatprep.subr.mxu0 0.0
  %699 = vmatpush1.msra.mxu0 0.0
  %700 = vmatprep.subr.mxu0 0.0
  %701 = vmatpush1.msra.mxu0 0.0
  %702 = vmatprep.subr.mxu0 0.0
  %703 = vmatpush1.msra.mxu0 0.0
  %704 = vmatprep.subr.mxu0 0.0
  %705 = vmatpush1.msra.mxu0 0.0
  %706 = vmatprep.subr.mxu0 0.0
  %707 = vmatpush1.msra.mxu0 0.0
  %708 = vmatprep.subr.mxu0 0.0
  %709 = vmatpush1.msra.mxu0 0.0
  %710 = vmatprep.subr.mxu0 0.0
  %711 = vmatpush1.msra.mxu0 0.0
  %712 = vmatprep.mubr.f32.mxu0 0.0
  %713 = vmatmul.mubr.f32.gmra.mrb[0].mxu0 %v641
  %v714 = vpop.f32.mrb[0].mxu0
  %v715 = vadd.f32 0.0, %v714
  %v716 = vpop.f32.mrb[0].mxu0
  %717 = vmatprep.mubr.f32.mxu0 0.0
  %718 = vmatmul.mubr.f32.gmra.mrb[0].mxu0 %v643
  %v719 = vpop.f32.mrb[0].mxu0
  %v720 = vadd.f32 0.0, %v719
  %v721 = vpop.f32.mrb[0].mxu0
  %722 = vmatprep.mubr.f32.mxu0 0.0
  %723 = vmatmul.mubr.f32.gmra.mrb[0].mxu0 %v645
  %v724 = vpop.f32.mrb[0].mxu0
  %v725 = vadd.f32 0.0, %v724
  %v726 = vpop.f32.mrb[0].mxu0
  %727 = vmatprep.mubr.f32.mxu0 0.0
  %728 = vmatmul.mubr.f32.gmra.mrb[0].mxu0 %v647
  %v729 = vpop.f32.mrb[0].mxu0
  %v730 = vadd.f32 0.0, %v729
  %v731 = vpop.f32.mrb[0].mxu0
  %732 = vdwg.mxu0
  %v733 = vrcp.pop %v715
  %v734 = vrcp.pop %v720
  %v735 = vrcp.pop %v725
  %v736 = vrcp.pop %v730
  %v737 = vmul.f32 %v641, %v733
  %v738 = vmul.f32 %v643, %v734
  %v739 = vmul.f32 %v645, %v735
  %v740 = vmul.f32 %v647, %v736
  %v741 = vmul.f32 %v737, %v91
  %v742 = vmul.f32 %v738, %v92
  %v743 = vmul.f32 %v739, %v93
  %v744 = vmul.f32 %v740, %v94
  %761 = vrot.lane.b32.xlu0 %v515, 96
  %v762 = vpop.permute.xlu0 %761
  %763 = vrot.lane.b32.xlu0 %v516, 96
  %v764 = vpop.permute.xlu0 %763
  %765 = vrot.lane.b32.xlu0 %v517, 96
  %v766 = vpop.permute.xlu0 %765
  %767 = vrot.lane.b32.xlu0 %v518, 96
  %v768 = vpop.permute.xlu0 %767
  %769 = vrot.lane.b32.xlu0 %v519, 96
  %v770 = vpop.permute.xlu0 %769
  %771 = vrot.lane.b32.xlu0 %v520, 96
  %v772 = vpop.permute.xlu0 %771
  %773 = vrot.lane.b32.xlu0 %v521, 96
  %v774 = vpop.permute.xlu0 %773
  %775 = vrot.lane.b32.xlu0 %v522, 96
  %v776 = vpop.permute.xlu0 %775
  %777 = vrot.lane.b32.xlu0 %v523, 96
  %v778 = vpop.permute.xlu0 %777
  %779 = vrot.lane.b32.xlu0 %v524, 96
  %v780 = vpop.permute.xlu0 %779
  %781 = vrot.lane.b32.xlu0 %v525, 96
  %v782 = vpop.permute.xlu0 %781
  %783 = vrot.lane.b32.xlu0 %v526, 96
  %v784 = vpop.permute.xlu0 %783
  %785 = vrot.lane.b32.xlu0 %v527, 96
  %v786 = vpop.permute.xlu0 %785
  %787 = vrot.lane.b32.xlu0 %v528, 96
  %v788 = vpop.permute.xlu0 %787
  %789 = vrot.lane.b32.xlu0 %v529, 96
  %v790 = vpop.permute.xlu0 %789
  %791 = vrot.lane.b32.xlu0 %v530, 96
  %v792 = vpop.permute.xlu0 %791
  %809 = vmatprep.subr.mxu0 0.0
  %810 = vmatpush1.msra.mxu0 %v762
  %811 = vmatprep.subr.mxu0 0.0
  %812 = vmatpush1.msra.mxu0 %v764
  %813 = vmatprep.subr.mxu0 0.0
  %814 = vmatpush1.msra.mxu0 %v766
  %815 = vmatprep.subr.mxu0 0.0
  %816 = vmatpush1.msra.mxu0 %v768
  %817 = vmatprep.subr.mxu0 0.0
  %818 = vmatpush1.msra.mxu0 %v770
  %819 = vmatprep.subr.mxu0 0.0
  %820 = vmatpush1.msra.mxu0 %v772
  %821 = vmatprep.subr.mxu0 0.0
  %822 = vmatpush1.msra.mxu0 %v774
  %823 = vmatprep.subr.mxu0 0.0
  %824 = vmatpush1.msra.mxu0 %v776
  %825 = vmatprep.subr.mxu0 0.0
  %826 = vmatpush1.msra.mxu0 %v778
  %827 = vmatprep.subr.mxu0 0.0
  %828 = vmatpush1.msra.mxu0 %v780
  %829 = vmatprep.subr.mxu0 0.0
  %830 = vmatpush1.msra.mxu0 %v782
  %831 = vmatprep.subr.mxu0 0.0
  %832 = vmatpush1.msra.mxu0 %v784
  %833 = vmatprep.subr.mxu0 0.0
  %834 = vmatpush1.msra.mxu0 %v786
  %835 = vmatprep.subr.mxu0 0.0
  %836 = vmatpush1.msra.mxu0 %v788
  %837 = vmatprep.subr.mxu0 0.0
  %838 = vmatpush1.msra.mxu0 %v790
  %839 = vmatprep.subr.mxu0 0.0
  %840 = vmatpush1.msra.mxu0 %v792
  %841 = vmatprep.subr.mxu0 0.0
  %842 = vmatpush1.msra.mxu0 0.0
  %843 = vmatprep.subr.mxu0 0.0
  %844 = vmatpush1.msra.mxu0 0.0
  %845 = vmatprep.subr.mxu0 0.0
  %846 = vmatpush1.msra.mxu0 0.0
  %847 = vmatprep.subr.mxu0 0.0
  %848 = vmatpush1.msra.mxu0 0.0
  %849 = vmatprep.subr.mxu0 0.0
  %850 = vmatpush1.msra.mxu0 0.0
  %851 = vmatprep.subr.mxu0 0.0
  %852 = vmatpush1.msra.mxu0 0.0
  %853 = vmatprep.subr.mxu0 0.0
  %854 = vmatpush1.msra.mxu0 0.0
  %855 = vmatprep.subr.mxu0 0.0
  %856 = vmatpush1.msra.mxu0 0.0
  %857 = vmatprep.subr.mxu0 0.0
  %858 = vmatpush1.msra.mxu0 0.0
  %859 = vmatprep.subr.mxu0 0.0
  %860 = vmatpush1.msra.mxu0 0.0
  %861 = vmatprep.subr.mxu0 0.0
  %862 = vmatpush1.msra.mxu0 0.0
  %863 = vmatprep.subr.mxu0 0.0
  %864 = vmatpush1.msra.mxu0 0.0
  %865 = vmatprep.subr.mxu0 0.0
  %866 = vmatpush1.msra.mxu0 0.0
  %867 = vmatprep.subr.mxu0 0.0
  %868 = vmatpush1.msra.mxu0 0.0
  %869 = vmatprep.subr.mxu0 0.0
  %870 = vmatpush1.msra.mxu0 0.0
  %871 = vmatprep.subr.mxu0 0.0
  %872 = vmatpush1.msra.mxu0 0.0
  %873 = vmatprep.mubr.f32.mxu0 0.0
  %874 = vmatmul.mubr.f32.gmra.mrb[0].mxu0 %v741
  %v875 = vpop.f32.mrb[0].mxu0
  %v876 = vadd.f32 0.0, %v875
  %v877 = vpop.f32.mrb[0].mxu0
  %878 = vmatprep.mubr.f32.mxu0 0.0
  %879 = vmatmul.mubr.f32.gmra.mrb[0].mxu0 %v742
  %v880 = vpop.f32.mrb[0].mxu0
  %v881 = vadd.f32 0.0, %v880
  %v882 = vpop.f32.mrb[0].mxu0
  %883 = vmatprep.mubr.f32.mxu0 0.0
  %884 = vmatmul.mubr.f32.gmra.mrb[0].mxu0 %v743
  %v885 = vpop.f32.mrb[0].mxu0
  %v886 = vadd.f32 0.0, %v885
  %v887 = vpop.f32.mrb[0].mxu0
  %888 = vmatprep.mubr.f32.mxu0 0.0
  %889 = vmatmul.mubr.f32.gmra.mrb[0].mxu0 %v744
  %v890 = vpop.f32.mrb[0].mxu0
  %v891 = vadd.f32 0.0, %v890
  %v892 = vpop.f32.mrb[0].mxu0
  %893 = vdwg.mxu0
  %v894 = vlaneseq
  %v895 = vshrl.u32 %v894, 7
  %v896 = vsub.s32 6, %v895
  %v897 = vrot.slane %v66, %v896
  %v899 = vsel %vm127, %v876, 0
  %v902 = vsel %vm127, %v881, 0
  %v905 = vsel %vm127, %v886, 0
  %v908 = vsel %vm127, %v891, 0
  %910 = vmatprep.subr.mxu0 0.0
  %911 = vmatpush1.msra.mxu0 %v54
  %912 = vmatprep.subr.mxu0 0.0
  %913 = vmatpush1.msra.mxu0 %v55
  %914 = vmatprep.subr.mxu0 0.0
  %915 = vmatpush1.msra.mxu0 %v56
  %916 = vmatprep.subr.mxu0 0.0
  %917 = vmatpush1.msra.mxu0 %v57
  %918 = vmatprep.subr.mxu0 0.0
  %919 = vmatpush1.msra.mxu0 0.0
  %920 = vmatprep.subr.mxu0 0.0
  %921 = vmatpush1.msra.mxu0 0.0
  %922 = vmatprep.subr.mxu0 0.0
  %923 = vmatpush1.msra.mxu0 0.0
  %924 = vmatprep.subr.mxu0 0.0
  %925 = vmatpush1.msra.mxu0 0.0
  %926 = vmatprep.subr.mxu0 0.0
  %927 = vmatpush1.msra.mxu0 0.0
  %928 = vmatprep.subr.mxu0 0.0
  %929 = vmatpush1.msra.mxu0 0.0
  %930 = vmatprep.subr.mxu0 0.0
  %931 = vmatpush1.msra.mxu0 0.0
  %932 = vmatprep.subr.mxu0 0.0
  %933 = vmatpush1.msra.mxu0 0.0
  %934 = vmatprep.subr.mxu0 0.0
  %935 = vmatpush1.msra.mxu0 0.0
  %936 = vmatprep.subr.mxu0 0.0
  %937 = vmatpush1.msra.mxu0 0.0
  %938 = vmatprep.subr.mxu0 0.0
  %939 = vmatpush1.msra.mxu0 0.0
  %940 = vmatprep.subr.mxu0 0.0
  %941 = vmatpush1.msra.mxu0 0.0
  %942 = vmatprep.subr.mxu0 0.0
  %943 = vmatpush1.msra.mxu0 0.0
  %944 = vmatprep.subr.mxu0 0.0
  %945 = vmatpush1.msra.mxu0 0.0
  %946 = vmatprep.subr.mxu0 0.0
  %947 = vmatpush1.msra.mxu0 0.0
  %948 = vmatprep.subr.mxu0 0.0
  %949 = vmatpush1.msra.mxu0 0.0
  %950 = vmatprep.subr.mxu0 0.0
  %951 = vmatpush1.msra.mxu0 0.0
  %952 = vmatprep.subr.mxu0 0.0
  %953 = vmatpush1.msra.mxu0 0.0
  %954 = vmatprep.subr.mxu0 0.0
  %955 = vmatpush1.msra.mxu0 0.0
  %956 = vmatprep.subr.mxu0 0.0
  %957 = vmatpush1.msra.mxu0 0.0
  %958 = vmatprep.subr.mxu0 0.0
  %959 = vmatpush1.msra.mxu0 0.0
  %960 = vmatprep.subr.mxu0 0.0
  %961 = vmatpush1.msra.mxu0 0.0
  %962 = vmatprep.subr.mxu0 0.0
  %963 = vmatpush1.msra.mxu0 0.0
  %964 = vmatprep.subr.mxu0 0.0
  %965 = vmatpush1.msra.mxu0 0.0
  %966 = vmatprep.subr.mxu0 0.0
  %967 = vmatpush1.msra.mxu0 0.0
  %968 = vmatprep.subr.mxu0 0.0
  %969 = vmatpush1.msra.mxu0 0.0
  %970 = vmatprep.subr.mxu0 0.0
  %971 = vmatpush1.msra.mxu0 0.0
  %972 = vmatprep.subr.mxu0 0.0
  %973 = vmatpush1.msra.mxu0 0.0
  %974 = vmatprep.mubr.f32.mxu0 0.0
  %975 = vmatmul.mubr.f32.gmra.mrb[0].mxu0 %v899
  %v976 = vpop.f32.mrb[0].mxu0
  %v977 = vadd.f32 %v897, %v976
  %v978 = vpop.f32.mrb[0].mxu0
  %979 = vmatprep.mubr.f32.mxu0 0.0
  %980 = vmatmul.mubr.f32.gmra.mrb[0].mxu0 %v902
  %v981 = vpop.f32.mrb[0].mxu0
  %v982 = vadd.f32 %v897, %v981
  %v983 = vpop.f32.mrb[0].mxu0
  %984 = vmatprep.mubr.f32.mxu0 0.0
  %985 = vmatmul.mubr.f32.gmra.mrb[0].mxu0 %v905
  %v986 = vpop.f32.mrb[0].mxu0
  %v987 = vadd.f32 %v897, %v986
  %v988 = vpop.f32.mrb[0].mxu0
  %989 = vmatprep.mubr.f32.mxu0 0.0
  %990 = vmatmul.mubr.f32.gmra.mrb[0].mxu0 %v908
  %v991 = vpop.f32.mrb[0].mxu0
  %v992 = vadd.f32 %v897, %v991
  %v993 = vpop.f32.mrb[0].mxu0
  %994 = vdwg.mxu0
  %995 = vmatprep.subr.mxu0 0.0
  %996 = vmatpush1.msra.mxu0 %v111
  %997 = vmatprep.subr.mxu0 0.0
  %998 = vmatpush1.msra.mxu0 %v112
  %999 = vmatprep.subr.mxu0 0.0
  %1000 = vmatpush1.msra.mxu0 %v113
  %1001 = vmatprep.subr.mxu0 0.0
  %1002 = vmatpush1.msra.mxu0 %v114
  %1003 = vmatprep.subr.mxu0 0.0
  %1004 = vmatpush1.msra.mxu0 %v115
  %1005 = vmatprep.subr.mxu0 0.0
  %1006 = vmatpush1.msra.mxu0 %v116
  %1007 = vmatprep.subr.mxu0 0.0
  %1008 = vmatpush1.msra.mxu0 %v117
  %1009 = vmatprep.subr.mxu0 0.0
  %1010 = vmatpush1.msra.mxu0 %v118
  %1011 = vmatprep.subr.mxu0 0.0
  %1012 = vmatpush1.msra.mxu0 %v119
  %1013 = vmatprep.subr.mxu0 0.0
  %1014 = vmatpush1.msra.mxu0 %v120
  %1015 = vmatprep.subr.mxu0 0.0
  %1016 = vmatpush1.msra.mxu0 %v121
  %1017 = vmatprep.subr.mxu0 0.0
  %1018 = vmatpush1.msra.mxu0 %v122
  %1019 = vmatprep.subr.mxu0 0.0
  %1020 = vmatpush1.msra.mxu0 %v123
  %1021 = vmatprep.subr.mxu0 0.0
  %1022 = vmatpush1.msra.mxu0 %v124
  %1023 = vmatprep.subr.mxu0 0.0
  %1024 = vmatpush1.msra.mxu0 %v125
  %1025 = vmatprep.subr.mxu0 0.0
  %1026 = vmatpush1.msra.mxu0 %v126
  %1027 = vmatprep.subr.mxu0 0.0
  %1028 = vmatpush1.msra.mxu0 0.0
  %1029 = vmatprep.subr.mxu0 0.0
  %1030 = vmatpush1.msra.mxu0 0.0
  %1031 = vmatprep.subr.mxu0 0.0
  %1032 = vmatpush1.msra.mxu0 0.0
  %1033 = vmatprep.subr.mxu0 0.0
  %1034 = vmatpush1.msra.mxu0 0.0
  %1035 = vmatprep.subr.mxu0 0.0
  %1036 = vmatpush1.msra.mxu0 0.0
  %1037 = vmatprep.subr.mxu0 0.0
  %1038 = vmatpush1.msra.mxu0 0.0
  %1039 = vmatprep.subr.mxu0 0.0
  %1040 = vmatpush1.msra.mxu0 0.0
  %1041 = vmatprep.subr.mxu0 0.0
  %1042 = vmatpush1.msra.mxu0 0.0
  %1043 = vmatprep.subr.mxu0 0.0
  %1044 = vmatpush1.msra.mxu0 0.0
  %1045 = vmatprep.subr.mxu0 0.0
  %1046 = vmatpush1.msra.mxu0 0.0
  %1047 = vmatprep.subr.mxu0 0.0
  %1048 = vmatpush1.msra.mxu0 0.0
  %1049 = vmatprep.subr.mxu0 0.0
  %1050 = vmatpush1.msra.mxu0 0.0
  %1051 = vmatprep.subr.mxu0 0.0
  %1052 = vmatpush1.msra.mxu0 0.0
  %1053 = vmatprep.subr.mxu0 0.0
  %1054 = vmatpush1.msra.mxu0 0.0
  %1055 = vmatprep.subr.mxu0 0.0
  %1056 = vmatpush1.msra.mxu0 0.0
  %1057 = vmatprep.subr.mxu0 0.0
  %1058 = vmatpush1.msra.mxu0 0.0
  %1059 = vmatprep.mubr.f32.mxu0 0.0
  %1060 = vmatmul.mubr.f32.gmra.mrb[0].mxu0 %v743
  %v1061 = vpop.f32.mrb[0].mxu0
  %v1062 = vadd.f32 0.0, %v1061
  %v1063 = vpop.f32.mrb[0].mxu0
  %1064 = vmatprep.mubr.f32.mxu0 0.0
  %1065 = vmatmul.mubr.f32.gmra.mrb[0].mxu0 %v744
  %v1066 = vpop.f32.mrb[0].mxu0
  %v1067 = vadd.f32 0.0, %v1066
  %v1068 = vpop.f32.mrb[0].mxu0
  %1069 = vdwg.mxu0
  %v1070 = vsel %vm127, %v977, 0.0
  %1071 = vadd.xlane.f32.xlu0 %v1070
  %v1072 = vpop.xlane.xlu0 %1071
  %v1073 = vsel %vm127, %v982, 0.0
  %1074 = vadd.xlane.f32.xlu0 %v1073
  %v1075 = vpop.xlane.xlu0 %1074
  %v1076 = vsel %vm127, %v987, 0.0
  %1077 = vadd.xlane.f32.xlu0 %v1076
  %v1078 = vpop.xlane.xlu0 %1077
  %v1079 = vsel %vm127, %v992, 0.0
  %1080 = vadd.xlane.f32.xlu0 %v1079
  %v1081 = vpop.xlane.xlu0 %1080
  %v1082 = vmul.f32 %v1072, %v140
  %v1083 = vmul.f32 %v1075, %v140
  %v1084 = vmul.f32 %v1078, %v140
  %v1085 = vmul.f32 %v1081, %v140
  %v1086 = vsub.f32 %v977, %v1082
  %v1087 = vsub.f32 %v982, %v1083
  %v1088 = vsub.f32 %v987, %v1084
  %v1089 = vsub.f32 %v992, %v1085
  %v1090 = vmul.f32 %v1086, %v1086
  %v1091 = vmul.f32 %v1087, %v1087
  %v1092 = vmul.f32 %v1088, %v1088
  %v1093 = vmul.f32 %v1089, %v1089
  %v1094 = vsel %vm127, %v1090, 0.0
  %1095 = vadd.xlane.f32.xlu0 %v1094
  %v1096 = vpop.xlane.xlu0 %1095
  %v1097 = vsel %vm127, %v1091, 0.0
  %1098 = vadd.xlane.f32.xlu0 %v1097
  %v1099 = vpop.xlane.xlu0 %1098
  %v1100 = vsel %vm127, %v1092, 0.0
  %1101 = vadd.xlane.f32.xlu0 %v1100
  %v1102 = vpop.xlane.xlu0 %1101
  %v1103 = vsel %vm127, %v1093, 0.0
  %1104 = vadd.xlane.f32.xlu0 %v1103
  %v1105 = vpop.xlane.xlu0 %1104
  %v1106 = vmul.f32 %v1096, %v140
  %v1107 = vmul.f32 %v1099, %v140
  %v1108 = vmul.f32 %v1102, %v140
  %v1109 = vmul.f32 %v1105, %v140
  %v1110 = vadd.f32 %v1106, 1e-05
  %v1111 = vadd.f32 %v1107, 1e-05
  %v1112 = vadd.f32 %v1108, 1e-05
  %v1113 = vadd.f32 %v1109, 1e-05
  %v1114 = vrsqrt.pop %v1110
  %v1115 = vrsqrt.pop %v1111
  %v1116 = vrsqrt.pop %v1112
  %v1117 = vrsqrt.pop %v1113
  %v1118 = vmul.f32 %v1086, %v1114
  %v1119 = vmul.f32 %v1087, %v1115
  %v1120 = vmul.f32 %v1088, %v1116
  %v1121 = vmul.f32 %v1089, %v1117
  %v1122 = vlaneseq
  %v1123 = vshrl.u32 %v1122, 7
  %v1124 = vsub.s32 2, %v1123
  %v1125 = vrot.slane %v66, %v1124
  %v1126 = vmul.f32 %v1118, %v1125
  %v1127 = vmul.f32 %v1119, %v1125
  %v1128 = vmul.f32 %v1120, %v1125
  %v1129 = vmul.f32 %v1121, %v1125
  %v1130 = vlaneseq
  %v1131 = vshrl.u32 %v1130, 7
  %v1132 = vsub.s32 3, %v1131
  %v1133 = vrot.slane %v66, %v1132
  %v1134 = vadd.f32 %v1126, %v1133
  %v1135 = vadd.f32 %v1127, %v1133
  %v1136 = vadd.f32 %v1128, %v1133
  %v1137 = vadd.f32 %v1129, %v1133
  %v1138 = vlaneseq
  %v1139 = vshrl.u32 %v1138, 7
  %v1140 = vsub.s32 0, %v1139
  %v1141 = vrot.slane %v49, %v1140
  %v1143 = vsel %vm127, %v1134, 0
  %v1146 = vsel %vm127, %v1135, 0
  %v1149 = vsel %vm127, %v1136, 0
  %v1152 = vsel %vm127, %v1137, 0
  %1154 = vmatprep.subr.mxu0 0.0
  %1155 = vmatpush1.msra.mxu0 %v45
  %1156 = vmatprep.subr.mxu0 0.0
  %1157 = vmatpush1.msra.mxu0 %v46
  %1158 = vmatprep.subr.mxu0 0.0
  %1159 = vmatpush1.msra.mxu0 %v47
  %1160 = vmatprep.subr.mxu0 0.0
  %1161 = vmatpush1.msra.mxu0 %v48
  %1162 = vmatprep.subr.mxu0 0.0
  %1163 = vmatpush1.msra.mxu0 0.0
  %1164 = vmatprep.subr.mxu0 0.0
  %1165 = vmatpush1.msra.mxu0 0.0
  %1166 = vmatprep.subr.mxu0 0.0
  %1167 = vmatpush1.msra.mxu0 0.0
  %1168 = vmatprep.subr.mxu0 0.0
  %1169 = vmatpush1.msra.mxu0 0.0
  %1170 = vmatprep.subr.mxu0 0.0
  %1171 = vmatpush1.msra.mxu0 0.0
  %1172 = vmatprep.subr.mxu0 0.0
  %1173 = vmatpush1.msra.mxu0 0.0
  %1174 = vmatprep.subr.mxu0 0.0
  %1175 = vmatpush1.msra.mxu0 0.0
  %1176 = vmatprep.subr.mxu0 0.0
  %1177 = vmatpush1.msra.mxu0 0.0
  %1178 = vmatprep.subr.mxu0 0.0
  %1179 = vmatpush1.msra.mxu0 0.0
  %1180 = vmatprep.subr.mxu0 0.0
  %1181 = vmatpush1.msra.mxu0 0.0
  %1182 = vmatprep.subr.mxu0 0.0
  %1183 = vmatpush1.msra.mxu0 0.0
  %1184 = vmatprep.subr.mxu0 0.0
  %1185 = vmatpush1.msra.mxu0 0.0
  %1186 = vmatprep.subr.mxu0 0.0
  %1187 = vmatpush1.msra.mxu0 0.0
  %1188 = vmatprep.subr.mxu0 0.0
  %1189 = vmatpush1.msra.mxu0 0.0
  %1190 = vmatprep.subr.mxu0 0.0
  %1191 = vmatpush1.msra.mxu0 0.0
  %1192 = vmatprep.subr.mxu0 0.0
  %1193 = vmatpush1.msra.mxu0 0.0
  %1194 = vmatprep.subr.mxu0 0.0
  %1195 = vmatpush1.msra.mxu0 0.0
  %1196 = vmatprep.subr.mxu0 0.0
  %1197 = vmatpush1.msra.mxu0 0.0
  %1198 = vmatprep.subr.mxu0 0.0
  %1199 = vmatpush1.msra.mxu0 0.0
  %1200 = vmatprep.subr.mxu0 0.0
  %1201 = vmatpush1.msra.mxu0 0.0
  %1202 = vmatprep.subr.mxu0 0.0
  %1203 = vmatpush1.msra.mxu0 0.0
  %1204 = vmatprep.subr.mxu0 0.0
  %1205 = vmatpush1.msra.mxu0 0.0
  %1206 = vmatprep.subr.mxu0 0.0
  %1207 = vmatpush1.msra.mxu0 0.0
  %1208 = vmatprep.subr.mxu0 0.0
  %1209 = vmatpush1.msra.mxu0 0.0
  %1210 = vmatprep.subr.mxu0 0.0
  %1211 = vmatpush1.msra.mxu0 0.0
  %1212 = vmatprep.subr.mxu0 0.0
  %1213 = vmatpush1.msra.mxu0 0.0
  %1214 = vmatprep.subr.mxu0 0.0
  %1215 = vmatpush1.msra.mxu0 0.0
  %1216 = vmatprep.subr.mxu0 0.0
  %1217 = vmatpush1.msra.mxu0 0.0
  %1218 = vmatprep.mubr.f32.mxu0 0.0
  %1219 = vmatmul.mubr.f32.gmra.mrb[0].mxu0 %v1143
  %v1220 = vpop.f32.mrb[0].mxu0
  %v1221 = vadd.f32 %v1141, %v1220
  %v1222 = vpop.f32.mrb[0].mxu0
  %1223 = vmatprep.mubr.f32.mxu0 0.0
  %1224 = vmatmul.mubr.f32.gmra.mrb[0].mxu0 %v1146
  %v1225 = vpop.f32.mrb[0].mxu0
  %v1226 = vadd.f32 %v1141, %v1225
  %v1227 = vpop.f32.mrb[0].mxu0
  %1228 = vmatprep.mubr.f32.mxu0 0.0
  %1229 = vmatmul.mubr.f32.gmra.mrb[0].mxu0 %v1149
  %v1230 = vpop.f32.mrb[0].mxu0
  %v1231 = vadd.f32 %v1141, %v1230
  %v1232 = vpop.f32.mrb[0].mxu0
  %1233 = vmatprep.mubr.f32.mxu0 0.0
  %1234 = vmatmul.mubr.f32.gmra.mrb[0].mxu0 %v1152
  %v1235 = vpop.f32.mrb[0].mxu0
  %v1236 = vadd.f32 %v1141, %v1235
  %v1237 = vpop.f32.mrb[0].mxu0
  %1238 = vdwg.mxu0
  %v1239 = vmul.f32 %v1221, 0.5
  %v1240 = vmul.f32 %v1226, 0.5
  %v1241 = vmul.f32 %v1231, 0.5
  %v1242 = vmul.f32 %v1236, 0.5
  %v1243 = vmul.f32 %v1221, 0.70710677
  %v1244 = vmul.f32 %v1226, 0.70710677
  %v1245 = vmul.f32 %v1231, 0.70710677
  %v1246 = vmul.f32 %v1236, 0.70710677
  %v1247 = vand.u32 2147483647, %v1243
  %v1248 = vand.u32 2147483647, %v1244
  %v1249 = vand.u32 2147483647, %v1245
  %v1250 = vand.u32 2147483647, %v1246
  %v1251 = vmul.f32 %v1247, 0.3275911
  %v1252 = vmul.f32 %v1248, 0.3275911
  %v1253 = vmul.f32 %v1249, 0.3275911
  %v1254 = vmul.f32 %v1250, 0.3275911
  %v1255 = vadd.f32 %v1251, 1.0
  %v1256 = vadd.f32 %v1252, 1.0
  %v1257 = vadd.f32 %v1253, 1.0
  %v1258 = vadd.f32 %v1254, 1.0
  %v1259 = vrcp.pop %v1255
  %v1260 = vmul.f32 1.0, %v1259
  %v1261 = vrcp.pop %v1256
  %v1262 = vmul.f32 1.0, %v1261
  %v1263 = vrcp.pop %v1257
  %v1264 = vmul.f32 1.0, %v1263
  %v1265 = vrcp.pop %v1258
  %v1266 = vmul.f32 1.0, %v1265
  %v1267 = vmul.f32 %v1260, 1.0614054
  %v1268 = vmul.f32 %v1262, 1.0614054
  %v1269 = vmul.f32 %v1264, 1.0614054
  %v1270 = vmul.f32 %v1266, 1.0614054
  %v1271 = vadd.f32 %v1267, -1.4531521
  %v1272 = vadd.f32 %v1268, -1.4531521
  %v1273 = vadd.f32 %v1269, -1.4531521
  %v1274 = vadd.f32 %v1270, -1.4531521
  %v1275 = vmul.f32 %v1271, %v1260
  %v1276 = vmul.f32 %v1272, %v1262
  %v1277 = vmul.f32 %v1273, %v1264
  %v1278 = vmul.f32 %v1274, %v1266
  %v1279 = vadd.f32 %v1275, 1.4214138
  %v1280 = vadd.f32 %v1276, 1.4214138
  %v1281 = vadd.f32 %v1277, 1.4214138
  %v1282 = vadd.f32 %v1278, 1.4214138
  %v1283 = vmul.f32 %v1279, %v1260
  %v1284 = vmul.f32 %v1280, %v1262
  %v1285 = vmul.f32 %v1281, %v1264
  %v1286 = vmul.f32 %v1282, %v1266
  %v1287 = vadd.f32 %v1283, -0.28449672
  %v1288 = vadd.f32 %v1284, -0.28449672
  %v1289 = vadd.f32 %v1285, -0.28449672
  %v1290 = vadd.f32 %v1286, -0.28449672
  %v1291 = vmul.f32 %v1287, %v1260
  %v1292 = vmul.f32 %v1288, %v1262
  %v1293 = vmul.f32 %v1289, %v1264
  %v1294 = vmul.f32 %v1290, %v1266
  %v1295 = vadd.f32 %v1291, 0.2548296
  %v1296 = vadd.f32 %v1292, 0.2548296
  %v1297 = vadd.f32 %v1293, 0.2548296
  %v1298 = vadd.f32 %v1294, 0.2548296
  %v1299 = vmul.f32 %v1295, %v1260
  %v1300 = vmul.f32 %v1296, %v1262
  %v1301 = vmul.f32 %v1297, %v1264
  %v1302 = vmul.f32 %v1298, %v1266
  %v1303 = vsub.f32 0.0, %v1247
  %v1304 = vsub.f32 0.0, %v1248
  %v1305 = vsub.f32 0.0, %v1249
  %v1306 = vsub.f32 0.0, %v1250
  %v1307 = vmul.f32 %v1303, %v1247
  %v1308 = vmul.f32 %v1304, %v1248
  %v1309 = vmul.f32 %v1305, %v1249
  %v1310 = vmul.f32 %v1306, %v1250
  %v1311 = vmul.f32 %v1307, 1.442695
  %v1312 = vpow.pop %v1311
  %v1313 = vmul.f32 %v1308, 1.442695
  %v1314 = vpow.pop %v1313
  %v1315 = vmul.f32 %v1309, 1.442695
  %v1316 = vpow.pop %v1315
  %v1317 = vmul.f32 %v1310, 1.442695
  %v1318 = vpow.pop %v1317
  %v1319 = vmul.f32 %v1299, %v1312
  %v1320 = vmul.f32 %v1300, %v1314
  %v1321 = vmul.f32 %v1301, %v1316
  %v1322 = vmul.f32 %v1302, %v1318
  %v1323 = vsub.f32 1.0, %v1319
  %v1324 = vsub.f32 1.0, %v1320
  %v1325 = vsub.f32 1.0, %v1321
  %v1326 = vsub.f32 1.0, %v1322
  %vm1327 = vcmp.ge.f32.partialorder %v1243, 0.0
  %vm1328 = vcmp.ge.f32.partialorder %v1244, 0.0
  %vm1329 = vcmp.ge.f32.partialorder %v1245, 0.0
  %vm1330 = vcmp.ge.f32.partialorder %v1246, 0.0
  %v1331 = vsub.f32 0.0, %v1323
  %v1332 = vsub.f32 0.0, %v1324
  %v1333 = vsub.f32 0.0, %v1325
  %v1334 = vsub.f32 0.0, %v1326
  %v1335 = vsel %vm1327, %v1323, %v1331
  %v1336 = vsel %vm1328, %v1324, %v1332
  %v1337 = vsel %vm1329, %v1325, %v1333
  %v1338 = vsel %vm1330, %v1326, %v1334
  %v1339 = vadd.f32 %v1335, 1.0
  %v1340 = vadd.f32 %v1336, 1.0
  %v1341 = vadd.f32 %v1337, 1.0
  %v1342 = vadd.f32 %v1338, 1.0
  %v1343 = vmul.f32 %v1239, %v1339
  %v1344 = vmul.f32 %v1240, %v1340
  %v1345 = vmul.f32 %v1241, %v1341
  %v1346 = vmul.f32 %v1242, %v1342
  %v1347 = vlaneseq
  %v1348 = vshrl.u32 %v1347, 7
  %v1349 = vsub.s32 7, %v1348
  %v1350 = vrot.slane %v66, %v1349
  %vm1351 = vcmask 523264
  %v1353 = vsel %vm1351, %v1343, 0
  %v1356 = vsel %vm1351, %v1344, 0
  %v1359 = vsel %vm1351, %v1345, 0
  %v1362 = vsel %vm1351, %v1346, 0
  %1364 = vmatprep.subr.mxu0 0.0
  %1365 = vmatpush1.msra.mxu0 %v58
  %1366 = vmatprep.subr.mxu0 0.0
  %1367 = vmatpush1.msra.mxu0 %v59
  %1368 = vmatprep.subr.mxu0 0.0
  %1369 = vmatpush1.msra.mxu0 %v60
  %1370 = vmatprep.subr.mxu0 0.0
  %1371 = vmatpush1.msra.mxu0 %v61
  %1372 = vmatprep.subr.mxu0 0.0
  %1373 = vmatpush1.msra.mxu0 %v62
  %1374 = vmatprep.subr.mxu0 0.0
  %1375 = vmatpush1.msra.mxu0 %v63
  %1376 = vmatprep.subr.mxu0 0.0
  %1377 = vmatpush1.msra.mxu0 %v64
  %1378 = vmatprep.subr.mxu0 0.0
  %1379 = vmatpush1.msra.mxu0 %v65
  %1380 = vmatprep.subr.mxu0 0.0
  %1381 = vmatpush1.msra.mxu0 0.0
  %1382 = vmatprep.subr.mxu0 0.0
  %1383 = vmatpush1.msra.mxu0 0.0
  %1384 = vmatprep.subr.mxu0 0.0
  %1385 = vmatpush1.msra.mxu0 0.0
  %1386 = vmatprep.subr.mxu0 0.0
  %1387 = vmatpush1.msra.mxu0 0.0
  %1388 = vmatprep.subr.mxu0 0.0
  %1389 = vmatpush1.msra.mxu0 0.0
  %1390 = vmatprep.subr.mxu0 0.0
  %1391 = vmatpush1.msra.mxu0 0.0
  %1392 = vmatprep.subr.mxu0 0.0
  %1393 = vmatpush1.msra.mxu0 0.0
  %1394 = vmatprep.subr.mxu0 0.0
  %1395 = vmatpush1.msra.mxu0 0.0
  %1396 = vmatprep.subr.mxu0 0.0
  %1397 = vmatpush1.msra.mxu0 0.0
  %1398 = vmatprep.subr.mxu0 0.0
  %1399 = vmatpush1.msra.mxu0 0.0
  %1400 = vmatprep.subr.mxu0 0.0
  %1401 = vmatpush1.msra.mxu0 0.0
  %1402 = vmatprep.subr.mxu0 0.0
  %1403 = vmatpush1.msra.mxu0 0.0
  %1404 = vmatprep.subr.mxu0 0.0
  %1405 = vmatpush1.msra.mxu0 0.0
  %1406 = vmatprep.subr.mxu0 0.0
  %1407 = vmatpush1.msra.mxu0 0.0
  %1408 = vmatprep.subr.mxu0 0.0
  %1409 = vmatpush1.msra.mxu0 0.0
  %1410 = vmatprep.subr.mxu0 0.0
  %1411 = vmatpush1.msra.mxu0 0.0
  %1412 = vmatprep.subr.mxu0 0.0
  %1413 = vmatpush1.msra.mxu0 0.0
  %1414 = vmatprep.subr.mxu0 0.0
  %1415 = vmatpush1.msra.mxu0 0.0
  %1416 = vmatprep.subr.mxu0 0.0
  %1417 = vmatpush1.msra.mxu0 0.0
  %1418 = vmatprep.subr.mxu0 0.0
  %1419 = vmatpush1.msra.mxu0 0.0
  %1420 = vmatprep.subr.mxu0 0.0
  %1421 = vmatpush1.msra.mxu0 0.0
  %1422 = vmatprep.subr.mxu0 0.0
  %1423 = vmatpush1.msra.mxu0 0.0
  %1424 = vmatprep.subr.mxu0 0.0
  %1425 = vmatpush1.msra.mxu0 0.0
  %1426 = vmatprep.subr.mxu0 0.0
  %1427 = vmatpush1.msra.mxu0 0.0
  %1428 = vmatprep.mubr.f32.mxu0 0.0
  %1429 = vmatmul.mubr.f32.gmra.mrb[0].mxu0 %v1353
  %v1430 = vpop.f32.mrb[0].mxu0
  %v1431 = vadd.f32 %v1350, %v1430
  %v1432 = vpop.f32.mrb[0].mxu0
  %1433 = vmatprep.mubr.f32.mxu0 0.0
  %1434 = vmatmul.mubr.f32.gmra.mrb[0].mxu0 %v1356
  %v1435 = vpop.f32.mrb[0].mxu0
  %v1436 = vadd.f32 %v1350, %v1435
  %v1437 = vpop.f32.mrb[0].mxu0
  %1438 = vmatprep.mubr.f32.mxu0 0.0
  %1439 = vmatmul.mubr.f32.gmra.mrb[0].mxu0 %v1359
  %v1440 = vpop.f32.mrb[0].mxu0
  %v1441 = vadd.f32 %v1350, %v1440
  %v1442 = vpop.f32.mrb[0].mxu0
  %1443 = vmatprep.mubr.f32.mxu0 0.0
  %1444 = vmatmul.mubr.f32.gmra.mrb[0].mxu0 %v1362
  %v1445 = vpop.f32.mrb[0].mxu0
  %v1446 = vadd.f32 %v1350, %v1445
  %v1447 = vpop.f32.mrb[0].mxu0
  %1448 = vdwg.mxu0
  %v1449 = vadd.f32 %v977, %v1431
  %v1450 = vadd.f32 %v982, %v1436
  %v1451 = vadd.f32 %v987, %v1441
  %v1452 = vadd.f32 %v992, %v1446
  %1453 = vst.msk [vmem:[%s8] sm:$0xff] %vm127, %v1449
  %1454 = vst.msk [vmem:[%s8 + $0x8] sm:$0xff] %vm127, %v1450
  %1455 = vst.msk [vmem:[%s8 + $0x10] sm:$0xff] %vm127, %v1451
  %1456 = vst.msk [vmem:[%s8 + $0x18] sm:$0xff] %vm127, %v1452
  %1457 = vst.msk [vmem:[%s8 + $0x20] sm:$0xff] %vm127, %v1062
  %1458 = vst.msk [vmem:[%s8 + $0x28] sm:$0xff] %vm127, %v1067
  // Predicated region
  $region34: #{decoder_layer_forward.1} parent=0 // pred_check
    _
  $region35: #{decoder_layer_forward.1} parent=0 // pred_check_branch
    %1460 = sbr.rel (0) target = $region37
  $region36: #{decoder_layer_forward.1} parent=0 // pred_region
    _
  $region37: #{decoder_layer_forward.1} parent=0 // pred_fallthru
    _
  // Predicated region
  $region38: #{decoder_layer_forward.1} parent=0 // pred_check
    _
  $region39: #{decoder_layer_forward.1} parent=0 // pred_check_branch
    %1462 = sbr.rel (0) target = $region41
  $region40: #{decoder_layer_forward.1} parent=0 // pred_region
    _
  $region41: #{decoder_layer_forward.1} parent=0 // pred_fallthru
    _

</llo_original>
